<compile_context>
chip_gen: v5e
topology: v5e:2x2
jax: 0.10.0
libtpu: 0.0.40
codegen_flags: <defaults>
</compile_context>

<pallas_src>
import functools

import jax
import jax.numpy as jnp
from jax.experimental import pallas as pl
from jax.experimental.pallas import tpu as pltpu


def _vq_kernel(z_ref, emb_ref, esq_ref, q_ref, idx_ref):
    z = z_ref[...]                    # (tm, D), input dtype
    e = emb_ref[...]                  # (K, D), codebook dtype
    e_sq = esq_ref[...]               # (1, K), f32

    tm = z.shape[0]
    K = e.shape[0]

    # -2 * z @ e^T, contracting the D axis of both operands (no transpose of e).
    # The -2 scale is applied to the (tm, D) LHS, not the (tm, K) result.
    neg2cross = jax.lax.dot_general(
        z * jnp.asarray(-2.0, z.dtype), e,
        dimension_numbers=(((1,), (1,)), ((), ())),
        preferred_element_type=jnp.float32)            # (tm, K) f32

    # ||z||^2 is constant across K, so it does not affect the argmin.
    score = neg2cross + e_sq                            # (tm, K) f32
    idx = jnp.argmin(score, axis=1).astype(jnp.int32)   # (tm,)
    idx_ref[...] = idx[None, :]                         # lane-dense (1, tm) store

    # Gather codebook rows via one-hot matmul (MXU-friendly, no dynamic gather).
    # Kept in f32 so quantized rows are bit-exact copies of the codebook rows.
    onehot = (jax.lax.broadcasted_iota(jnp.int32, (tm, K), 1)
              == idx[:, None]).astype(jnp.float32)      # (tm, K)
    q_ref[...] = jax.lax.dot_general(
        onehot, e.astype(jnp.float32),
        dimension_numbers=(((1,), (0,)), ((), ())),
        preferred_element_type=jnp.float32).astype(q_ref.dtype)


def _pick_tm(M, D, K, vmem_budget=24 << 20):
    """Largest row tile (multiple of 128) whose working set fits a conservative
    VMEM budget, preferring >= 2 grid steps so the row axis can use both
    TensorCores on v7x."""
    best = 128
    for tm in (1024, 512, 256, 128):
        est = (4 * tm * D * 4          # z + q tiles, double-buffered
               + 2 * K * D * 4         # codebook, double-buffered by BlockSpec
               + 2 * K * 4             # e_sq, double-buffered
               + 2 * tm * 4            # idx tile
               + 2 * tm * K * 4)       # (tm, K) f32 distance + one-hot live values
        if est > vmem_budget:
            continue
        if pl.cdiv(M, tm) >= 2:
            return tm
        best = tm                      # fits, but only one grid step; keep looking
    return best


def vector_quantize(z_flat, embedding, *, tm=None):
    """z_flat: (M, D) float; embedding: (K, D) float.
    Returns (quantized (M, D), encoding_indices (M,) int32)."""
    M, D = z_flat.shape
    K, D2 = embedding.shape
    assert D == D2

    if tm is None:
        tm = _pick_tm(M, D, K)

    # Pad rows to a multiple of the tile; padded rows are sliced off afterwards.
    M_pad = pl.cdiv(M, tm) * tm
    if M_pad != M:
        z_flat = jnp.pad(z_flat, ((0, M_pad - M), (0, 0)))
    grid = (M_pad // tm,)

    # Hoisted out of the grid loop: ||e||^2 computed once, streamed as (1, K).
    e_sq = jnp.sum(embedding.astype(jnp.float32) ** 2, axis=1)[None, :]

    # NOTE: for very large K (e.g. 8192+) on v7x, add a K grid axis marked
    # "arbitrary" with a running min/argmin in VMEM scratch, and single-buffer
    # the grid-invariant codebook block; not needed at these sizes.
    quantized, idx2d = pl.pallas_call(
        _vq_kernel,
        out_shape=(
            jax.ShapeDtypeStruct((M_pad, D), z_flat.dtype),
            jax.ShapeDtypeStruct((1, M_pad), jnp.int32),
        ),
        grid_spec=pltpu.PrefetchScalarGridSpec(
            num_scalar_prefetch=0,
            grid=grid,
            in_specs=[
                pl.BlockSpec((tm, D), lambda i: (i, 0)),   # z row tile
                pl.BlockSpec((K, D), lambda i: (0, 0)),    # full codebook (grid-invariant)
                pl.BlockSpec((1, K), lambda i: (0, 0)),    # precomputed ||e||^2
            ],
            out_specs=[
                pl.BlockSpec((tm, D), lambda i: (i, 0)),   # quantized rows
                pl.BlockSpec((1, tm), lambda i: (0, i)),   # lane-dense indices
            ],
        ),
        compiler_params=pltpu.CompilerParams(
            dimension_semantics=("parallel",)),
    )(z_flat, embedding, e_sq)

    return quantized[:M], idx2d[0, :M]


class VectorQuantizer:
    def __init__(self, n_embeddings, embedding_dim, key):
        self.n_embeddings = n_embeddings
        self.embedding_dim = embedding_dim
        # nn.Embedding default init: N(0, 1)
        self.embedding_weight = jax.random.normal(
            key, (n_embeddings, embedding_dim), dtype=jnp.float32)

    def __call__(self, z):
        # z: (..., embedding_dim), channel-last
        z_flat = z.reshape(-1, self.embedding_dim)
        return vector_quantize(z_flat, self.embedding_weight)


if __name__ == "__main__":
    key = jax.random.PRNGKey(0)
    k_emb, k_z = jax.random.split(key)

    n_embeddings, embedding_dim = 64, 32
    B, H, W = 2, 16, 16  # M = 2*16*16 = 512 rows

    vq = VectorQuantizer(n_embeddings, embedding_dim, k_emb)
    z = jax.random.normal(k_z, (B, H, W, embedding_dim), dtype=jnp.float32)

    quantized, indices = vq(z)
    quantized = jax.block_until_ready(quantized)
    indices = jax.block_until_ready(indices)

    # Pure-JAX reference check (same argmin-equivalent formulation as kernel).
    z_flat = z.reshape(-1, embedding_dim)
    w = vq.embedding_weight
    score_ref = jnp.sum(w ** 2, axis=1)[None, :] - 2.0 * z_flat @ w.T
    idx_ref = jnp.argmin(score_ref, axis=1).astype(jnp.int32)
    q_ref = w[idx_ref]

    assert quantized.shape == (B * H * W, embedding_dim)
    assert indices.shape == (B * H * W,)
    assert bool(jnp.all(indices == idx_ref))
    assert bool(jnp.allclose(quantized, q_ref, atol=1e-5))
    # Exact gather semantics: quantized rows are the codebook rows at `indices`.
    assert bool(jnp.all(quantized == w[indices]))

    print("KERNEL_OK")
</pallas_src>

<mosaic_0001>
module attributes {stable_mosaic.version = 11 : i64} {
  func.func @_vq_kernel(%arg0: i32, %arg1: memref<256x32xf32, #tpu.memory_space<vmem>>, %arg2: memref<64x32xf32, #tpu.memory_space<vmem>>, %arg3: memref<1x64xf32, #tpu.memory_space<vmem>>, %arg4: memref<256x32xf32, #tpu.memory_space<vmem>>, %arg5: memref<1x256xi32, #tpu.memory_space<vmem>>) attributes {dimension_semantics = [#tpu.dimension_semantics<parallel>], iteration_bounds = array<i64: 2>, scalar_prefetch = 0 : i64, scratch_operands = 0 : i64, tpu.core_type = #tpu.core_type<tc>, window_params = [{transform_indices = @transform_0, window_bounds = array<i64: 256, 32>}, {pipeline_mode = #tpu.pipeline_mode<synchronous>, transform_indices = @transform_1, window_bounds = array<i64: 64, 32>}, {pipeline_mode = #tpu.pipeline_mode<synchronous>, transform_indices = @transform_2, window_bounds = array<i64: 1, 64>}, {transform_indices = @transform_3, window_bounds = array<i64: 256, 32>}, {transform_indices = @transform_4, window_bounds = array<i64: 1, 256>}]} {
    %c0 = arith.constant 0 : index
    %c0_0 = arith.constant 0 : index
    %0 = vector.load %arg1[%c0, %c0_0] : memref<256x32xf32, #tpu.memory_space<vmem>>, vector<256x32xf32>
    %c0_1 = arith.constant 0 : index
    %c0_2 = arith.constant 0 : index
    %1 = vector.load %arg2[%c0_1, %c0_2] : memref<64x32xf32, #tpu.memory_space<vmem>>, vector<64x32xf32>
    %c0_3 = arith.constant 0 : index
    %c0_4 = arith.constant 0 : index
    %2 = vector.load %arg3[%c0_3, %c0_4] : memref<1x64xf32, #tpu.memory_space<vmem>>, vector<1x64xf32>
    %cst = arith.constant -2.000000e+00 : f32
    %3 = vector.broadcast %cst : f32 to vector<256x32xf32>
    %4 = arith.mulf %0, %3 : vector<256x32xf32>
    %cst_5 = arith.constant dense<0.000000e+00> : vector<256x64xf32>
    %5 = tpu.matmul %4, %1, %cst_5 {dimension_numbers = #tpu.dot_dimension_numbers<[1], [1], [0], [0], [0, 0, 1, 0], [], []>} : vector<256x32xf32>, vector<64x32xf32>, vector<256x64xf32> -> vector<256x64xf32>
    %6 = vector.broadcast %2 : vector<1x64xf32> to vector<256x64xf32>
    %7 = arith.addf %5, %6 : vector<256x64xf32>
    %8 = tpu.reduce_index %7 {axis = 1 : i32, kind = #tpu.reduction_kind<arg_min>} : vector<256x64xf32> -> vector<256xi32>
    %9 = vector.shape_cast %8 : vector<256xi32> to vector<1x256xi32>
    %c0_6 = arith.constant 0 : index
    %c0_7 = arith.constant 0 : index
    %10 = vector.load %arg5[%c0_6, %c0_7] : memref<1x256xi32, #tpu.memory_space<vmem>>, vector<1x256xi32>
    tpu.vector_store %arg5[%c0_6, %c0_7], %9 {strides = array<i32>} : memref<1x256xi32, #tpu.memory_space<vmem>>, vector<1x256xi32>,
    %11 = tpu.iota {dimensions = array<i32: 1>} : vector<256x64xi32>
    %12 = vector.shape_cast %8 : vector<256xi32> to vector<256x1xi32>
    %13 = vector.broadcast %12 : vector<256x1xi32> to vector<256x64xi32>
    %14 = arith.cmpi eq, %11, %13 : vector<256x64xi32>
    %15 = arith.extui %14 : vector<256x64xi1> to vector<256x64xi32>
    %16 = arith.sitofp %15 : vector<256x64xi32> to vector<256x64xf32>
    %cst_8 = arith.constant dense<0.000000e+00> : vector<256x32xf32>
    %17 = tpu.matmul %16, %1, %cst_8 {dimension_numbers = #tpu.dot_dimension_numbers<[1], [0], [0], [1], [0, 0, 1, 1], [], []>} : vector<256x64xf32>, vector<64x32xf32>, vector<256x32xf32> -> vector<256x32xf32>
    %c0_9 = arith.constant 0 : index
    %c0_10 = arith.constant 0 : index
    %18 = vector.load %arg4[%c0_9, %c0_10] : memref<256x32xf32, #tpu.memory_space<vmem>>, vector<256x32xf32>
    tpu.vector_store %arg4[%c0_9, %c0_10], %17 {strides = array<i32>} : memref<256x32xf32, #tpu.memory_space<vmem>>, vector<256x32xf32>,
    return
  }
  func.func @transform_0(%arg0: i32) -> (i32, i32) {
    %c0_i32 = arith.constant 0 : i32
    %c0_i32_0 = arith.constant 0 : i32
    return %arg0, %c0_i32 : i32, i32
  }
  func.func @transform_1(%arg0: i32) -> (i32, i32) {
    %c0_i32 = arith.constant 0 : i32
    %c0_i32_0 = arith.constant 0 : i32
    %c0_i32_1 = arith.constant 0 : i32
    return %c0_i32, %c0_i32_0 : i32, i32
  }
  func.func @transform_2(%arg0: i32) -> (i32, i32) {
    %c0_i32 = arith.constant 0 : i32
    %c0_i32_0 = arith.constant 0 : i32
    %c0_i32_1 = arith.constant 0 : i32
    return %c0_i32, %c0_i32_0 : i32, i32
  }
  func.func @transform_3(%arg0: i32) -> (i32, i32) {
    %c0_i32 = arith.constant 0 : i32
    %c0_i32_0 = arith.constant 0 : i32
    return %arg0, %c0_i32 : i32, i32
  }
  func.func @transform_4(%arg0: i32) -> (i32, i32) {
    %c0_i32 = arith.constant 0 : i32
    %c0_i32_0 = arith.constant 0 : i32
    return %c0_i32, %arg0 : i32, i32
  }
}

</mosaic_0001>

<llo_original>
// kernel: tpu_custom_call.1
$region0: #{tpu_custom_call.1}
  #allocation0 [shape = 'u32[]', space=smem, size = 0x4, offset = 0x4, fixed_abs, tag = 'smem constant byte address 0x4 - core index']
  #allocation1 [shape = 'u32[72,128]{1,0:T(1,128)}', space=vmem, size = 0x9000, scoped, tag = 'internal scratch']
  %s0 = inlined_call_operand.vmem [shape: f32[512,32], index: 0, kind: input, shape index: {}]
  %s1 = inlined_call_operand.vmem [shape: f32[64,32], index: 1, kind: input, shape index: {}]
  %s2 = inlined_call_operand.vmem [shape: f32[1,64], index: 2, kind: input, shape index: {}]
  %s3 = inlined_call_operand.vmem [shape: f32[512,32], index: 3, kind: output, shape index: {0}]
  %s4 = inlined_call_operand.hbm [shape: s32[1,512], index: 4, kind: output, shape index: {1}]
  %5 = xla_tuple %s3, %s4
  %s6 = sld [smem:[#allocation0]]
  $region53: #{tpu_custom_call.1} parent=0
    _
  %s8 = ssub.s32 1, %s6
  %s9 = scalar_select 0, %s8, %s6
  $region1: #{tpu_custom_call.1} parent=0
    #allocation2 [shape = 'u8[2048]{0}', space=vmem, size = 0x800, scoped, tag = 'output window, operand 1']
    #allocation3 [shape = 's32[2]{0}', space=sflag, size = 0x8, scoped, tag = 'scoped memory for tpu_custom_call.1']
    %10 = vsyncpa [#allocation3], 0
    %s11 = scalar_lea.sflag [#allocation3], 1
    %12 = vsyncpa %s11, 0
    loop: start=0, step=1, limit=4
    $region2: #{tpu_custom_call.1} parent=1 // loop_pre_header
      _
    $region3: #{tpu_custom_call.1} parent=1 // loop_header
      %s14 = sphi 0, %s18
      %p15 = scmp.ge.s32.totalorder %s14, 4
      %s24 = sphi 0, %s26
      %s27 = sphi 0, %s24
      %s28 = sphi 0, %s27
      %s44 = sphi 0, %s28
      %s48 = sphi 0, %s48
      %s50 = sphi 0, %s48
      %s51 = sphi 0, %s50
      %s65 = sphi 0, %s51
      %s69 = sphi 0, %s69
      %s71 = sphi 0, %s69
      %s72 = sphi 0, %s71
      %s86 = sphi 0, %s72
      %s92 = sphi 0, %s94
      %s95 = sphi 0, %s92
      %s96 = sphi 0, %s95
      %s112 = sphi 0, %s96
      %s118 = sphi 0, %s120
      %s121 = sphi 0, %s118
      %s122 = sphi 0, %s121
      %s138 = sphi 0, %s122
    $region4: #{tpu_custom_call.1} parent=1 // loop_header_branch
      %17 = sbr.rel (%p15) target = $region8
    $region5: #{tpu_custom_call.1} parent=1 // loop_body
      %s19 = ssub.s32 %s14, 1
      %s20 = ssub.s32 %s14, 2
      %s21 = sadd.s32 %s14, 1
      %s22 = ssub.s32 %s14, %s21
      %p23 = scmp.eq.s32.totalorder %s22, 0
      %s25 = sadd.s32 %s24, 1
      %s26 = scalar_select %p23, %s24, %s25
      %p29 = pneg %p23
      %p30 = scmp.eq.s32.totalorder %s14, 1
      %p31 = por %p29, %p30
      %p32 = scmp.ne.s32.totalorder %s24, %s27
      %p33 = scmp.eq.s32.totalorder %s14, 0
      %p34 = por %p32, %p33
      %p35 = scmp.ne.s32.totalorder %s24, %s27
      %p36 = scmp.eq.s32.totalorder %s19, 1
      %p37 = por %p35, %p36
      %p38 = scmp.ne.s32.totalorder %s27, %s28
      %p39 = scmp.eq.s32.totalorder %s19, 0
      %p40 = por %p38, %p39
      %p41 = scmp.ne.s32.totalorder %s27, %s28
      %p42 = scmp.eq.s32.totalorder %s20, 1
      %p43 = por %p41, %p42
      %p45 = scmp.ne.s32.totalorder %s28, %s44
      %p46 = scmp.eq.s32.totalorder %s20, 0
      %p47 = por %p45, %p46
      %s49 = sadd.s32 %s48, 1
      %p52 = scmp.eq.s32.totalorder %s14, 1
      %p53 = scmp.ne.s32.totalorder %s48, %s50
      %p54 = scmp.eq.s32.totalorder %s14, 0
      %p55 = por %p53, %p54
      %p56 = scmp.ne.s32.totalorder %s48, %s50
      %p57 = scmp.eq.s32.totalorder %s19, 1
      %p58 = por %p56, %p57
      %p59 = scmp.ne.s32.totalorder %s50, %s51
      %p60 = scmp.eq.s32.totalorder %s19, 0
      %p61 = por %p59, %p60
      %p62 = scmp.ne.s32.totalorder %s50, %s51
      %p63 = scmp.eq.s32.totalorder %s20, 1
      %p64 = por %p62, %p63
      %p66 = scmp.ne.s32.totalorder %s51, %s65
      %p67 = scmp.eq.s32.totalorder %s20, 0
      %p68 = por %p66, %p67
      %s70 = sadd.s32 %s69, 1
      %p73 = scmp.eq.s32.totalorder %s14, 1
      %p74 = scmp.ne.s32.totalorder %s69, %s71
      %p75 = scmp.eq.s32.totalorder %s14, 0
      %p76 = por %p74, %p75
      %p77 = scmp.ne.s32.totalorder %s69, %s71
      %p78 = scmp.eq.s32.totalorder %s19, 1
      %p79 = por %p77, %p78
      %p80 = scmp.ne.s32.totalorder %s71, %s72
      %p81 = scmp.eq.s32.totalorder %s19, 0
      %p82 = por %p80, %p81
      %p83 = scmp.ne.s32.totalorder %s71, %s72
      %p84 = scmp.eq.s32.totalorder %s20, 1
      %p85 = por %p83, %p84
      %p87 = scmp.ne.s32.totalorder %s72, %s86
      %p88 = scmp.eq.s32.totalorder %s20, 0
      %p89 = por %p87, %p88
      %s90 = ssub.s32 %s14, %s21
      %p91 = scmp.eq.s32.totalorder %s90, 0
      %s93 = sadd.s32 %s92, 1
      %s94 = scalar_select %p91, %s92, %s93
      %p97 = pneg %p91
      %p98 = scmp.eq.s32.totalorder %s14, 1
      %p99 = por %p97, %p98
      %p100 = scmp.ne.s32.totalorder %s92, %s95
      %p101 = scmp.eq.s32.totalorder %s14, 0
      %p102 = por %p100, %p101
      %p103 = scmp.ne.s32.totalorder %s92, %s95
      %p104 = scmp.eq.s32.totalorder %s19, 1
      %p105 = por %p103, %p104
      %p106 = scmp.ne.s32.totalorder %s95, %s96
      %p107 = scmp.eq.s32.totalorder %s19, 0
      %p108 = por %p106, %p107
      %p109 = scmp.ne.s32.totalorder %s95, %s96
      %p110 = scmp.eq.s32.totalorder %s20, 1
      %p111 = por %p109, %p110
      %p113 = scmp.ne.s32.totalorder %s96, %s112
      %p114 = scmp.eq.s32.totalorder %s20, 0
      %p115 = por %p113, %p114
      %s116 = ssub.s32 %s14, %s21
      %p117 = scmp.eq.s32.totalorder %s116, 0
      %s119 = sadd.s32 %s118, 1
      %s120 = scalar_select %p117, %s118, %s119
      %p123 = pneg %p117
      %p124 = scmp.eq.s32.totalorder %s14, 1
      %p125 = por %p123, %p124
      %p126 = scmp.ne.s32.totalorder %s118, %s121
      %p127 = scmp.eq.s32.totalorder %s14, 0
      %p128 = por %p126, %p127
      %p129 = scmp.ne.s32.totalorder %s118, %s121
      %p130 = scmp.eq.s32.totalorder %s19, 1
      %p131 = por %p129, %p130
      %p132 = scmp.ne.s32.totalorder %s121, %s122
      %p133 = scmp.eq.s32.totalorder %s19, 0
      %p134 = por %p132, %p133
      %p135 = scmp.ne.s32.totalorder %s121, %s122
      %p136 = scmp.eq.s32.totalorder %s20, 1
      %p137 = por %p135, %p136
      %p139 = scmp.ne.s32.totalorder %s122, %s138
      %p140 = scmp.eq.s32.totalorder %s20, 0
      %p141 = por %p139, %p140
      %p142 = scmp.le.s32.totalorder 1, %s14
      %p143 = scmp.lt.s32.totalorder %s14, 3
      %p144 = pnand %p142, %p143
      %p145 = pneg %p144
      // Predicated region
      $region9: #{tpu_custom_call.1} parent=5 // pred_check
        _
      $region10: #{tpu_custom_call.1} parent=5 // pred_check_branch
        %147 = sbr.rel (%p144) target = $region12
      $region11: #{tpu_custom_call.1} parent=5 // pred_region
        %s148 = ssub.s32 %s14, 1
        // Predicated region
        $region13: #{tpu_custom_call.1} parent=11 // pred_check
          %p149 = pneg %p61
        $region14: #{tpu_custom_call.1} parent=11 // pred_check_branch
          %151 = sbr.rel (%p149) target = $region16
        $region15: #{tpu_custom_call.1} parent=11 // pred_region
          _
        $region16: #{tpu_custom_call.1} parent=11 // pred_fallthru
          _
        // Predicated region
        $region17: #{tpu_custom_call.1} parent=11 // pred_check
          %p152 = pneg %p82
        $region18: #{tpu_custom_call.1} parent=11 // pred_check_branch
          %154 = sbr.rel (%p152) target = $region20
        $region19: #{tpu_custom_call.1} parent=11 // pred_region
          _
        $region20: #{tpu_custom_call.1} parent=11 // pred_fallthru
          _
      $region12: #{tpu_custom_call.1} parent=5 // pred_fallthru
        _
      %p155 = scmp.lt.s32.totalorder %s14, 2
      // Predicated region
      $region21: #{tpu_custom_call.1} parent=5 // pred_check
        %p156 = pneg %p155
      $region22: #{tpu_custom_call.1} parent=5 // pred_check_branch
        %158 = sbr.rel (%p156) target = $region24
      $region23: #{tpu_custom_call.1} parent=5 // pred_region
        // Predicated region
        $region25: #{tpu_custom_call.1} parent=23 // pred_check
          %p159 = pneg %p34
        $region26: #{tpu_custom_call.1} parent=23 // pred_check_branch
          %161 = sbr.rel (%p159) target = $region28
        $region27: #{tpu_custom_call.1} parent=23 // pred_region
          %s162 = smul.u32 32, %s14
          %p163 = scmp.lt.s32.totalorder %s162, 63
          %s164 = scalar_select %p163, %s162, 63
          %s165 = smul.addr %s164, 8
          %s166 = scalar_lea.vmem %s0, %s165
          %s167 = smul.u32 32, %s14
        $region28: #{tpu_custom_call.1} parent=23 // pred_fallthru
          _
      $region24: #{tpu_custom_call.1} parent=5 // pred_fallthru
        _
      %p168 = scmp.le.s32.totalorder 1, %s14
      %p169 = scmp.lt.s32.totalorder %s14, 3
      %p170 = pnand %p168, %p169
      %p171 = pneg %p170
      // Predicated region
      $region29: #{tpu_custom_call.1} parent=5 // pred_check
        _
      $region30: #{tpu_custom_call.1} parent=5 // pred_check_branch
        %173 = sbr.rel (%p170) target = $region32
      $region31: #{tpu_custom_call.1} parent=5 // pred_region
        %s174 = ssub.s32 %s14, 1
        %s175 = smul.u32 32, %s19
        %p176 = scmp.lt.s32.totalorder %s175, 63
        %s177 = scalar_select %p176, %s175, 63
        %s178 = smul.addr %s177, 8
        %s179 = scalar_lea.vmem %s0, %s178
        %p180 = pneg %p40
        %p181 = pneg %p37
        %p182 = pneg %p61
        %p183 = pneg %p58
        %p184 = pneg %p82
        %p185 = pneg %p79
        %p186 = pneg %p108
        %p187 = pneg %p105
        %s188 = smul.u32 32, %s19
        %p189 = scmp.lt.s32.totalorder %s188, 63
        %s190 = scalar_select %p189, %s188, 63
        %s191 = smul.addr %s190, 8
        %s192 = scalar_lea.vmem %s3, %s191
        %p193 = pneg %p134
        %p194 = pneg %p131
        %s195 = sand.u32 %s121, 1
        %s196 = scalar_lea.sflag [#allocation3], %s195
        %s197 = sand.u32 %s121, 1
        %s198 = smul.addr %s197, 2
        %s199 = scalar_lea.vmem [#allocation2], %s198
        %s200 = smul.u32 32, %s19
        %p201 = scmp.lt.s32.totalorder %s200, 63
        %s202 = scalar_select %p201, %s200, 63
        %s203 = smul.addr %s202, 8
        %s204 = scalar_lea.vmem %s0, %s203
        %s205 = smul.u32 32, %s19
        %s206 = smul.u32 32, %s19
        %p207 = scmp.lt.s32.totalorder %s206, 63
        %s208 = scalar_select %p207, %s206, 63
        %s209 = smul.addr %s208, 8
        %s210 = scalar_lea.vmem %s3, %s209
        %s211 = smul.u32 32, %s19
        %s212 = smul.u32 2, %s19
        %v213 = vld [vmem:[%s204] sm:$0xff]
        %v214 = vld [vmem:[%s204 + $0x8] sm:$0xff]
        %v215 = vld [vmem:[%s204 + $0x10] sm:$0xff]
        %v216 = vld [vmem:[%s204 + $0x18] sm:$0xff]
        %v217 = vld [vmem:[%s204 + $0x20] sm:$0xff]
        %v218 = vld [vmem:[%s204 + $0x28] sm:$0xff]
        %v219 = vld [vmem:[%s204 + $0x30] sm:$0xff]
        %v220 = vld [vmem:[%s204 + $0x38] sm:$0xff]
        %v221 = vld [vmem:[%s204 + $0x40] sm:$0xff]
        %v222 = vld [vmem:[%s204 + $0x48] sm:$0xff]
        %v223 = vld [vmem:[%s204 + $0x50] sm:$0xff]
        %v224 = vld [vmem:[%s204 + $0x58] sm:$0xff]
        %v225 = vld [vmem:[%s204 + $0x60] sm:$0xff]
        %v226 = vld [vmem:[%s204 + $0x68] sm:$0xff]
        %v227 = vld [vmem:[%s204 + $0x70] sm:$0xff]
        %v228 = vld [vmem:[%s204 + $0x78] sm:$0xff]
        %v229 = vld [vmem:[%s204 + $0x80] sm:$0xff]
        %v230 = vld [vmem:[%s204 + $0x88] sm:$0xff]
        %v231 = vld [vmem:[%s204 + $0x90] sm:$0xff]
        %v232 = vld [vmem:[%s204 + $0x98] sm:$0xff]
        %v233 = vld [vmem:[%s204 + $0xa0] sm:$0xff]
        %v234 = vld [vmem:[%s204 + $0xa8] sm:$0xff]
        %v235 = vld [vmem:[%s204 + $0xb0] sm:$0xff]
        %v236 = vld [vmem:[%s204 + $0xb8] sm:$0xff]
        %v237 = vld [vmem:[%s204 + $0xc0] sm:$0xff]
        %v238 = vld [vmem:[%s204 + $0xc8] sm:$0xff]
        %v239 = vld [vmem:[%s204 + $0xd0] sm:$0xff]
        %v240 = vld [vmem:[%s204 + $0xd8] sm:$0xff]
        %v241 = vld [vmem:[%s204 + $0xe0] sm:$0xff]
        %v242 = vld [vmem:[%s204 + $0xe8] sm:$0xff]
        %v243 = vld [vmem:[%s204 + $0xf0] sm:$0xff]
        %v244 = vld [vmem:[%s204 + $0xf8] sm:$0xff]
        %v245 = vld [vmem:[%s1] sm:$0xff]
        %v246 = vld [vmem:[%s1 + $0x8] sm:$0xff]
        %v247 = vld [vmem:[%s1 + $0x10] sm:$0xff]
        %v248 = vld [vmem:[%s1 + $0x18] sm:$0xff]
        %v249 = vld [vmem:[%s1 + $0x20] sm:$0xff]
        %v250 = vld [vmem:[%s1 + $0x28] sm:$0xff]
        %v251 = vld [vmem:[%s1 + $0x30] sm:$0xff]
        %v252 = vld [vmem:[%s1 + $0x38] sm:$0xff]
        %v253 = vld [vmem:[%s2] sm:$0x1]
        %v254 = vmul.f32 %v213, -2.0
        %v255 = vmul.f32 %v214, -2.0
        %v256 = vmul.f32 %v215, -2.0
        %v257 = vmul.f32 %v216, -2.0
        %v258 = vmul.f32 %v217, -2.0
        %v259 = vmul.f32 %v218, -2.0
        %v260 = vmul.f32 %v219, -2.0
        %v261 = vmul.f32 %v220, -2.0
        %v262 = vmul.f32 %v221, -2.0
        %v263 = vmul.f32 %v222, -2.0
        %v264 = vmul.f32 %v223, -2.0
        %v265 = vmul.f32 %v224, -2.0
        %v266 = vmul.f32 %v225, -2.0
        %v267 = vmul.f32 %v226, -2.0
        %v268 = vmul.f32 %v227, -2.0
        %v269 = vmul.f32 %v228, -2.0
        %v270 = vmul.f32 %v229, -2.0
        %v271 = vmul.f32 %v230, -2.0
        %v272 = vmul.f32 %v231, -2.0
        %v273 = vmul.f32 %v232, -2.0
        %v274 = vmul.f32 %v233, -2.0
        %v275 = vmul.f32 %v234, -2.0
        %v276 = vmul.f32 %v235, -2.0
        %v277 = vmul.f32 %v236, -2.0
        %v278 = vmul.f32 %v237, -2.0
        %v279 = vmul.f32 %v238, -2.0
        %v280 = vmul.f32 %v239, -2.0
        %v281 = vmul.f32 %v240, -2.0
        %v282 = vmul.f32 %v241, -2.0
        %v283 = vmul.f32 %v242, -2.0
        %v284 = vmul.f32 %v243, -2.0
        %v285 = vmul.f32 %v244, -2.0
        %v287 = vperm.slane %v253, 0
        %vm289 = vcmask 261120
        %v291 = vsel %vm289, %v254, 0
        %v294 = vsel %vm289, %v255, 0
        %v297 = vsel %vm289, %v256, 0
        %v300 = vsel %vm289, %v257, 0
        %v303 = vsel %vm289, %v258, 0
        %v306 = vsel %vm289, %v259, 0
        %v309 = vsel %vm289, %v260, 0
        %v312 = vsel %vm289, %v261, 0
        %v315 = vsel %vm289, %v262, 0
        %v318 = vsel %vm289, %v263, 0
        %v321 = vsel %vm289, %v264, 0
        %v324 = vsel %vm289, %v265, 0
        %v327 = vsel %vm289, %v266, 0
        %v330 = vsel %vm289, %v267, 0
        %v333 = vsel %vm289, %v268, 0
        %v336 = vsel %vm289, %v269, 0
        %v339 = vsel %vm289, %v270, 0
        %v342 = vsel %vm289, %v271, 0
        %v345 = vsel %vm289, %v272, 0
        %v348 = vsel %vm289, %v273, 0
        %v351 = vsel %vm289, %v274, 0
        %v354 = vsel %vm289, %v275, 0
        %v357 = vsel %vm289, %v276, 0
        %v360 = vsel %vm289, %v277, 0
        %v363 = vsel %vm289, %v278, 0
        %v366 = vsel %vm289, %v279, 0
        %v369 = vsel %vm289, %v280, 0
        %v372 = vsel %vm289, %v281, 0
        %v375 = vsel %vm289, %v282, 0
        %v378 = vsel %vm289, %v283, 0
        %v381 = vsel %vm289, %v284, 0
        %v384 = vsel %vm289, %v285, 0
        %v387 = vsel %vm289, %v245, 0
        %v390 = vsel %vm289, %v246, 0
        %v393 = vsel %vm289, %v247, 0
        %v396 = vsel %vm289, %v248, 0
        %v399 = vsel %vm289, %v249, 0
        %v402 = vsel %vm289, %v250, 0
        %v405 = vsel %vm289, %v251, 0
        %v408 = vsel %vm289, %v252, 0
        %410 = vmatpush.xpose.msra.mxu0 0.0
        %411 = vmatpush.xpose.msra.mxu0 0.0
        %412 = vmatpush.xpose.msra.mxu0 0.0
        %413 = vmatpush.xpose.msra.mxu0 0.0
        %414 = vmatpush.xpose.msra.mxu0 0.0
        %415 = vmatpush.xpose.msra.mxu0 0.0
        %416 = vmatpush.xpose.msra.mxu0 0.0
        %417 = vmatpush.xpose.msra.mxu0 0.0
        %418 = vmatpush.xpose.msra.mxu0 %v408
        %419 = vmatpush.xpose.msra.mxu0 %v405
        %420 = vmatpush.xpose.msra.mxu0 %v402
        %421 = vmatpush.xpose.msra.mxu0 %v399
        %422 = vmatpush.xpose.msra.mxu0 %v396
        %423 = vmatpush.xpose.msra.mxu0 %v393
        %424 = vmatpush.xpose.msra.mxu0 %v390
        %425 = vmatpush.xpose.msra.mxu0 %v387
        %426 = vmatmul.f32.gmra.mxu0 %v291
        %v427 = vpop.f32.mrf.mxu0
        %v428 = vadd.f32 %v287, %v427
        %429 = vmatmul.f32.gmra.mxu0 %v294
        %v430 = vpop.f32.mrf.mxu0
        %v431 = vadd.f32 %v287, %v430
        %432 = vmatmul.f32.gmra.mxu0 %v297
        %v433 = vpop.f32.mrf.mxu0
        %v434 = vadd.f32 %v287, %v433
        %435 = vmatmul.f32.gmra.mxu0 %v300
        %v436 = vpop.f32.mrf.mxu0
        %v437 = vadd.f32 %v287, %v436
        %438 = vmatmul.f32.gmra.mxu0 %v303
        %v439 = vpop.f32.mrf.mxu0
        %v440 = vadd.f32 %v287, %v439
        %441 = vmatmul.f32.gmra.mxu0 %v306
        %v442 = vpop.f32.mrf.mxu0
        %v443 = vadd.f32 %v287, %v442
        %444 = vmatmul.f32.gmra.mxu0 %v309
        %v445 = vpop.f32.mrf.mxu0
        %v446 = vadd.f32 %v287, %v445
        %447 = vmatmul.f32.gmra.mxu0 %v312
        %v448 = vpop.f32.mrf.mxu0
        %v449 = vadd.f32 %v287, %v448
        %450 = vmatmul.f32.gmra.mxu0 %v315
        %v451 = vpop.f32.mrf.mxu0
        %v452 = vadd.f32 %v287, %v451
        %453 = vmatmul.f32.gmra.mxu0 %v318
        %v454 = vpop.f32.mrf.mxu0
        %v455 = vadd.f32 %v287, %v454
        %456 = vmatmul.f32.gmra.mxu0 %v321
        %v457 = vpop.f32.mrf.mxu0
        %v458 = vadd.f32 %v287, %v457
        %459 = vmatmul.f32.gmra.mxu0 %v324
        %v460 = vpop.f32.mrf.mxu0
        %v461 = vadd.f32 %v287, %v460
        %462 = vmatmul.f32.gmra.mxu0 %v327
        %v463 = vpop.f32.mrf.mxu0
        %v464 = vadd.f32 %v287, %v463
        %465 = vmatmul.f32.gmra.mxu0 %v330
        %v466 = vpop.f32.mrf.mxu0
        %v467 = vadd.f32 %v287, %v466
        %468 = vmatmul.f32.gmra.mxu0 %v333
        %v469 = vpop.f32.mrf.mxu0
        %v470 = vadd.f32 %v287, %v469
        %471 = vmatmul.f32.gmra.mxu0 %v336
        %v472 = vpop.f32.mrf.mxu0
        %v473 = vadd.f32 %v287, %v472
        %474 = vmatmul.f32.gmra.mxu0 %v339
        %v475 = vpop.f32.mrf.mxu0
        %v476 = vadd.f32 %v287, %v475
        %477 = vmatmul.f32.gmra.mxu0 %v342
        %v478 = vpop.f32.mrf.mxu0
        %v479 = vadd.f32 %v287, %v478
        %480 = vmatmul.f32.gmra.mxu0 %v345
        %v481 = vpop.f32.mrf.mxu0
        %v482 = vadd.f32 %v287, %v481
        %483 = vmatmul.f32.gmra.mxu0 %v348
        %v484 = vpop.f32.mrf.mxu0
        %v485 = vadd.f32 %v287, %v484
        %486 = vmatmul.f32.gmra.mxu0 %v351
        %v487 = vpop.f32.mrf.mxu0
        %v488 = vadd.f32 %v287, %v487
        %489 = vmatmul.f32.gmra.mxu0 %v354
        %v490 = vpop.f32.mrf.mxu0
        %v491 = vadd.f32 %v287, %v490
        %492 = vmatmul.f32.gmra.mxu0 %v357
        %v493 = vpop.f32.mrf.mxu0
        %v494 = vadd.f32 %v287, %v493
        %495 = vmatmul.f32.gmra.mxu0 %v360
        %v496 = vpop.f32.mrf.mxu0
        %v497 = vadd.f32 %v287, %v496
        %498 = vmatmul.f32.gmra.mxu0 %v363
        %v499 = vpop.f32.mrf.mxu0
        %v500 = vadd.f32 %v287, %v499
        %501 = vmatmul.f32.gmra.mxu0 %v366
        %v502 = vpop.f32.mrf.mxu0
        %v503 = vadd.f32 %v287, %v502
        %504 = vmatmul.f32.gmra.mxu0 %v369
        %v505 = vpop.f32.mrf.mxu0
        %v506 = vadd.f32 %v287, %v505
        %507 = vmatmul.f32.gmra.mxu0 %v372
        %v508 = vpop.f32.mrf.mxu0
        %v509 = vadd.f32 %v287, %v508
        %510 = vmatmul.f32.gmra.mxu0 %v375
        %v511 = vpop.f32.mrf.mxu0
        %v512 = vadd.f32 %v287, %v511
        %513 = vmatmul.f32.gmra.mxu0 %v378
        %v514 = vpop.f32.mrf.mxu0
        %v515 = vadd.f32 %v287, %v514
        %516 = vmatmul.f32.gmra.mxu0 %v381
        %v517 = vpop.f32.mrf.mxu0
        %v518 = vadd.f32 %v287, %v517
        %519 = vmatmul.f32.gmra.mxu0 %v384
        %v520 = vpop.f32.mrf.mxu0
        %v521 = vadd.f32 %v287, %v520
        %522 = vdwg.mxu0
        %vm523 = vcmask 523264
        %v524 = vsel %vm523, %v428, inf
        %525 = vmin.index.xlane.f32.xlu0 %v524
        %v526 = vpop.xlane.xlu0 %525
        %v527 = vsel %vm523, %v431, inf
        %528 = vmin.index.xlane.f32.xlu0 %v527
        %v529 = vpop.xlane.xlu0 %528
        %v530 = vsel %vm523, %v434, inf
        %531 = vmin.index.xlane.f32.xlu0 %v530
        %v532 = vpop.xlane.xlu0 %531
        %v533 = vsel %vm523, %v437, inf
        %534 = vmin.index.xlane.f32.xlu0 %v533
        %v535 = vpop.xlane.xlu0 %534
        %v536 = vsel %vm523, %v440, inf
        %537 = vmin.index.xlane.f32.xlu0 %v536
        %v538 = vpop.xlane.xlu0 %537
        %v539 = vsel %vm523, %v443, inf
        %540 = vmin.index.xlane.f32.xlu0 %v539
        %v541 = vpop.xlane.xlu0 %540
        %v542 = vsel %vm523, %v446, inf
        %543 = vmin.index.xlane.f32.xlu0 %v542
        %v544 = vpop.xlane.xlu0 %543
        %v545 = vsel %vm523, %v449, inf
        %546 = vmin.index.xlane.f32.xlu0 %v545
        %v547 = vpop.xlane.xlu0 %546
        %v548 = vsel %vm523, %v452, inf
        %549 = vmin.index.xlane.f32.xlu0 %v548
        %v550 = vpop.xlane.xlu0 %549
        %v551 = vsel %vm523, %v455, inf
        %552 = vmin.index.xlane.f32.xlu0 %v551
        %v553 = vpop.xlane.xlu0 %552
        %v554 = vsel %vm523, %v458, inf
        %555 = vmin.index.xlane.f32.xlu0 %v554
        %v556 = vpop.xlane.xlu0 %555
        %v557 = vsel %vm523, %v461, inf
        %558 = vmin.index.xlane.f32.xlu0 %v557
        %v559 = vpop.xlane.xlu0 %558
        %v560 = vsel %vm523, %v464, inf
        %561 = vmin.index.xlane.f32.xlu0 %v560
        %v562 = vpop.xlane.xlu0 %561
        %v563 = vsel %vm523, %v467, inf
        %564 = vmin.index.xlane.f32.xlu0 %v563
        %v565 = vpop.xlane.xlu0 %564
        %v566 = vsel %vm523, %v470, inf
        %567 = vmin.index.xlane.f32.xlu0 %v566
        %v568 = vpop.xlane.xlu0 %567
        %v569 = vsel %vm523, %v473, inf
        %570 = vmin.index.xlane.f32.xlu0 %v569
        %v571 = vpop.xlane.xlu0 %570
        %v572 = vsel %vm523, %v476, inf
        %573 = vmin.index.xlane.f32.xlu0 %v572
        %v574 = vpop.xlane.xlu0 %573
        %v575 = vsel %vm523, %v479, inf
        %576 = vmin.index.xlane.f32.xlu0 %v575
        %v577 = vpop.xlane.xlu0 %576
        %v578 = vsel %vm523, %v482, inf
        %579 = vmin.index.xlane.f32.xlu0 %v578
        %v580 = vpop.xlane.xlu0 %579
        %v581 = vsel %vm523, %v485, inf
        %582 = vmin.index.xlane.f32.xlu0 %v581
        %v583 = vpop.xlane.xlu0 %582
        %v584 = vsel %vm523, %v488, inf
        %585 = vmin.index.xlane.f32.xlu0 %v584
        %v586 = vpop.xlane.xlu0 %585
        %v587 = vsel %vm523, %v491, inf
        %588 = vmin.index.xlane.f32.xlu0 %v587
        %v589 = vpop.xlane.xlu0 %588
        %v590 = vsel %vm523, %v494, inf
        %591 = vmin.index.xlane.f32.xlu0 %v590
        %v592 = vpop.xlane.xlu0 %591
        %v593 = vsel %vm523, %v497, inf
        %594 = vmin.index.xlane.f32.xlu0 %v593
        %v595 = vpop.xlane.xlu0 %594
        %v596 = vsel %vm523, %v500, inf
        %597 = vmin.index.xlane.f32.xlu0 %v596
        %v598 = vpop.xlane.xlu0 %597
        %v599 = vsel %vm523, %v503, inf
        %600 = vmin.index.xlane.f32.xlu0 %v599
        %v601 = vpop.xlane.xlu0 %600
        %v602 = vsel %vm523, %v506, inf
        %603 = vmin.index.xlane.f32.xlu0 %v602
        %v604 = vpop.xlane.xlu0 %603
        %v605 = vsel %vm523, %v509, inf
        %606 = vmin.index.xlane.f32.xlu0 %v605
        %v607 = vpop.xlane.xlu0 %606
        %v608 = vsel %vm523, %v512, inf
        %609 = vmin.index.xlane.f32.xlu0 %v608
        %v610 = vpop.xlane.xlu0 %609
        %v611 = vsel %vm523, %v515, inf
        %612 = vmin.index.xlane.f32.xlu0 %v611
        %v613 = vpop.xlane.xlu0 %612
        %v614 = vsel %vm523, %v518, inf
        %615 = vmin.index.xlane.f32.xlu0 %v614
        %v616 = vpop.xlane.xlu0 %615
        %v617 = vsel %vm523, %v521, inf
        %618 = vmin.index.xlane.f32.xlu0 %v617
        %v619 = vpop.xlane.xlu0 %618
        %v620 = vperm.slane %v526, 0
        %v621 = vperm.slane %v526, 1
        %v622 = vperm.slane %v526, 2
        %v623 = vperm.slane %v526, 3
        %v624 = vperm.slane %v526, 4
        %v625 = vperm.slane %v526, 5
        %v626 = vperm.slane %v526, 6
        %v627 = vperm.slane %v526, 7
        %v628 = vperm.slane %v529, 0
        %v629 = vperm.slane %v529, 1
        %v630 = vperm.slane %v529, 2
        %v631 = vperm.slane %v529, 3
        %v632 = vperm.slane %v529, 4
        %v633 = vperm.slane %v529, 5
        %v634 = vperm.slane %v529, 6
        %v635 = vperm.slane %v529, 7
        %v636 = vperm.slane %v532, 0
        %v637 = vperm.slane %v532, 1
        %v638 = vperm.slane %v532, 2
        %v639 = vperm.slane %v532, 3
        %v640 = vperm.slane %v532, 4
        %v641 = vperm.slane %v532, 5
        %v642 = vperm.slane %v532, 6
        %v643 = vperm.slane %v532, 7
        %v644 = vperm.slane %v535, 0
        %v645 = vperm.slane %v535, 1
        %v646 = vperm.slane %v535, 2
        %v647 = vperm.slane %v535, 3
        %v648 = vperm.slane %v535, 4
        %v649 = vperm.slane %v535, 5
        %v650 = vperm.slane %v535, 6
        %v651 = vperm.slane %v535, 7
        %v652 = vperm.slane %v538, 0
        %v653 = vperm.slane %v538, 1
        %v654 = vperm.slane %v538, 2
        %v655 = vperm.slane %v538, 3
        %v656 = vperm.slane %v538, 4
        %v657 = vperm.slane %v538, 5
        %v658 = vperm.slane %v538, 6
        %v659 = vperm.slane %v538, 7
        %v660 = vperm.slane %v541, 0
        %v661 = vperm.slane %v541, 1
        %v662 = vperm.slane %v541, 2
        %v663 = vperm.slane %v541, 3
        %v664 = vperm.slane %v541, 4
        %v665 = vperm.slane %v541, 5
        %v666 = vperm.slane %v541, 6
        %v667 = vperm.slane %v541, 7
        %v668 = vperm.slane %v544, 0
        %v669 = vperm.slane %v544, 1
        %v670 = vperm.slane %v544, 2
        %v671 = vperm.slane %v544, 3
        %v672 = vperm.slane %v544, 4
        %v673 = vperm.slane %v544, 5
        %v674 = vperm.slane %v544, 6
        %v675 = vperm.slane %v544, 7
        %v676 = vperm.slane %v547, 0
        %v677 = vperm.slane %v547, 1
        %v678 = vperm.slane %v547, 2
        %v679 = vperm.slane %v547, 3
        %v680 = vperm.slane %v547, 4
        %v681 = vperm.slane %v547, 5
        %v682 = vperm.slane %v547, 6
        %v683 = vperm.slane %v547, 7
        %v684 = vperm.slane %v550, 0
        %v685 = vperm.slane %v550, 1
        %v686 = vperm.slane %v550, 2
        %v687 = vperm.slane %v550, 3
        %v688 = vperm.slane %v550, 4
        %v689 = vperm.slane %v550, 5
        %v690 = vperm.slane %v550, 6
        %v691 = vperm.slane %v550, 7
        %v692 = vperm.slane %v553, 0
        %v693 = vperm.slane %v553, 1
        %v694 = vperm.slane %v553, 2
        %v695 = vperm.slane %v553, 3
        %v696 = vperm.slane %v553, 4
        %v697 = vperm.slane %v553, 5
        %v698 = vperm.slane %v553, 6
        %v699 = vperm.slane %v553, 7
        %v700 = vperm.slane %v556, 0
        %v701 = vperm.slane %v556, 1
        %v702 = vperm.slane %v556, 2
        %v703 = vperm.slane %v556, 3
        %v704 = vperm.slane %v556, 4
        %v705 = vperm.slane %v556, 5
        %v706 = vperm.slane %v556, 6
        %v707 = vperm.slane %v556, 7
        %v708 = vperm.slane %v559, 0
        %v709 = vperm.slane %v559, 1
        %v710 = vperm.slane %v559, 2
        %v711 = vperm.slane %v559, 3
        %v712 = vperm.slane %v559, 4
        %v713 = vperm.slane %v559, 5
        %v714 = vperm.slane %v559, 6
        %v715 = vperm.slane %v559, 7
        %v716 = vperm.slane %v562, 0
        %v717 = vperm.slane %v562, 1
        %v718 = vperm.slane %v562, 2
        %v719 = vperm.slane %v562, 3
        %v720 = vperm.slane %v562, 4
        %v721 = vperm.slane %v562, 5
        %v722 = vperm.slane %v562, 6
        %v723 = vperm.slane %v562, 7
        %v724 = vperm.slane %v565, 0
        %v725 = vperm.slane %v565, 1
        %v726 = vperm.slane %v565, 2
        %v727 = vperm.slane %v565, 3
        %v728 = vperm.slane %v565, 4
        %v729 = vperm.slane %v565, 5
        %v730 = vperm.slane %v565, 6
        %v731 = vperm.slane %v565, 7
        %v732 = vperm.slane %v568, 0
        %v733 = vperm.slane %v568, 1
        %v734 = vperm.slane %v568, 2
        %v735 = vperm.slane %v568, 3
        %v736 = vperm.slane %v568, 4
        %v737 = vperm.slane %v568, 5
        %v738 = vperm.slane %v568, 6
        %v739 = vperm.slane %v568, 7
        %v740 = vperm.slane %v571, 0
        %v741 = vperm.slane %v571, 1
        %v742 = vperm.slane %v571, 2
        %v743 = vperm.slane %v571, 3
        %v744 = vperm.slane %v571, 4
        %v745 = vperm.slane %v571, 5
        %v746 = vperm.slane %v571, 6
        %v747 = vperm.slane %v571, 7
        %v748 = vperm.slane %v574, 0
        %v749 = vperm.slane %v574, 1
        %v750 = vperm.slane %v574, 2
        %v751 = vperm.slane %v574, 3
        %v752 = vperm.slane %v574, 4
        %v753 = vperm.slane %v574, 5
        %v754 = vperm.slane %v574, 6
        %v755 = vperm.slane %v574, 7
        %v756 = vperm.slane %v577, 0
        %v757 = vperm.slane %v577, 1
        %v758 = vperm.slane %v577, 2
        %v759 = vperm.slane %v577, 3
        %v760 = vperm.slane %v577, 4
        %v761 = vperm.slane %v577, 5
        %v762 = vperm.slane %v577, 6
        %v763 = vperm.slane %v577, 7
        %v764 = vperm.slane %v580, 0
        %v765 = vperm.slane %v580, 1
        %v766 = vperm.slane %v580, 2
        %v767 = vperm.slane %v580, 3
        %v768 = vperm.slane %v580, 4
        %v769 = vperm.slane %v580, 5
        %v770 = vperm.slane %v580, 6
        %v771 = vperm.slane %v580, 7
        %v772 = vperm.slane %v583, 0
        %v773 = vperm.slane %v583, 1
        %v774 = vperm.slane %v583, 2
        %v775 = vperm.slane %v583, 3
        %v776 = vperm.slane %v583, 4
        %v777 = vperm.slane %v583, 5
        %v778 = vperm.slane %v583, 6
        %v779 = vperm.slane %v583, 7
        %v780 = vperm.slane %v586, 0
        %v781 = vperm.slane %v586, 1
        %v782 = vperm.slane %v586, 2
        %v783 = vperm.slane %v586, 3
        %v784 = vperm.slane %v586, 4
        %v785 = vperm.slane %v586, 5
        %v786 = vperm.slane %v586, 6
        %v787 = vperm.slane %v586, 7
        %v788 = vperm.slane %v589, 0
        %v789 = vperm.slane %v589, 1
        %v790 = vperm.slane %v589, 2
        %v791 = vperm.slane %v589, 3
        %v792 = vperm.slane %v589, 4
        %v793 = vperm.slane %v589, 5
        %v794 = vperm.slane %v589, 6
        %v795 = vperm.slane %v589, 7
        %v796 = vperm.slane %v592, 0
        %v797 = vperm.slane %v592, 1
        %v798 = vperm.slane %v592, 2
        %v799 = vperm.slane %v592, 3
        %v800 = vperm.slane %v592, 4
        %v801 = vperm.slane %v592, 5
        %v802 = vperm.slane %v592, 6
        %v803 = vperm.slane %v592, 7
        %v804 = vperm.slane %v595, 0
        %v805 = vperm.slane %v595, 1
        %v806 = vperm.slane %v595, 2
        %v807 = vperm.slane %v595, 3
        %v808 = vperm.slane %v595, 4
        %v809 = vperm.slane %v595, 5
        %v810 = vperm.slane %v595, 6
        %v811 = vperm.slane %v595, 7
        %v812 = vperm.slane %v598, 0
        %v813 = vperm.slane %v598, 1
        %v814 = vperm.slane %v598, 2
        %v815 = vperm.slane %v598, 3
        %v816 = vperm.slane %v598, 4
        %v817 = vperm.slane %v598, 5
        %v818 = vperm.slane %v598, 6
        %v819 = vperm.slane %v598, 7
        %v820 = vperm.slane %v601, 0
        %v821 = vperm.slane %v601, 1
        %v822 = vperm.slane %v601, 2
        %v823 = vperm.slane %v601, 3
        %v824 = vperm.slane %v601, 4
        %v825 = vperm.slane %v601, 5
        %v826 = vperm.slane %v601, 6
        %v827 = vperm.slane %v601, 7
        %v828 = vperm.slane %v604, 0
        %v829 = vperm.slane %v604, 1
        %v830 = vperm.slane %v604, 2
        %v831 = vperm.slane %v604, 3
        %v832 = vperm.slane %v604, 4
        %v833 = vperm.slane %v604, 5
        %v834 = vperm.slane %v604, 6
        %v835 = vperm.slane %v604, 7
        %v836 = vperm.slane %v607, 0
        %v837 = vperm.slane %v607, 1
        %v838 = vperm.slane %v607, 2
        %v839 = vperm.slane %v607, 3
        %v840 = vperm.slane %v607, 4
        %v841 = vperm.slane %v607, 5
        %v842 = vperm.slane %v607, 6
        %v843 = vperm.slane %v607, 7
        %v844 = vperm.slane %v610, 0
        %v845 = vperm.slane %v610, 1
        %v846 = vperm.slane %v610, 2
        %v847 = vperm.slane %v610, 3
        %v848 = vperm.slane %v610, 4
        %v849 = vperm.slane %v610, 5
        %v850 = vperm.slane %v610, 6
        %v851 = vperm.slane %v610, 7
        %v852 = vperm.slane %v613, 0
        %v853 = vperm.slane %v613, 1
        %v854 = vperm.slane %v613, 2
        %v855 = vperm.slane %v613, 3
        %v856 = vperm.slane %v613, 4
        %v857 = vperm.slane %v613, 5
        %v858 = vperm.slane %v613, 6
        %v859 = vperm.slane %v613, 7
        %v860 = vperm.slane %v616, 0
        %v861 = vperm.slane %v616, 1
        %v862 = vperm.slane %v616, 2
        %v863 = vperm.slane %v616, 3
        %v864 = vperm.slane %v616, 4
        %v865 = vperm.slane %v616, 5
        %v866 = vperm.slane %v616, 6
        %v867 = vperm.slane %v616, 7
        %v868 = vperm.slane %v619, 0
        %v869 = vperm.slane %v619, 1
        %v870 = vperm.slane %v619, 2
        %v871 = vperm.slane %v619, 3
        %v872 = vperm.slane %v619, 4
        %v873 = vperm.slane %v619, 5
        %v874 = vperm.slane %v619, 6
        %v875 = vperm.slane %v619, 7
        %876 = vst [vmem:[#allocation1] ss:$9 sm:$0xff] %v620
        %s877 = scalar_lea.vmem [#allocation1], 1
        %878 = vst [vmem:[%s877] ss:$9 sm:$0xff] %v621
        %s879 = scalar_lea.vmem [#allocation1], 2
        %880 = vst [vmem:[%s879] ss:$9 sm:$0xff] %v622
        %s881 = scalar_lea.vmem [#allocation1], 3
        %882 = vst [vmem:[%s881] ss:$9 sm:$0xff] %v623
        %s883 = scalar_lea.vmem [#allocation1], 4
        %884 = vst [vmem:[%s883] ss:$9 sm:$0xff] %v624
        %s885 = scalar_lea.vmem [#allocation1], 5
        %886 = vst [vmem:[%s885] ss:$9 sm:$0xff] %v625
        %s887 = scalar_lea.vmem [#allocation1], 6
        %888 = vst [vmem:[%s887] ss:$9 sm:$0xff] %v626
        %s889 = scalar_lea.vmem [#allocation1], 7
        %890 = vst [vmem:[%s889] ss:$9 sm:$0xff] %v627
        %v891 = vld [vmem:[#allocation1] sm:$0xff]
        %892 = vst [vmem:[#allocation1] ss:$9 sm:$0xff] %v628
        %893 = vst [vmem:[%s877] ss:$9 sm:$0xff] %v629
        %894 = vst [vmem:[%s879] ss:$9 sm:$0xff] %v630
        %895 = vst [vmem:[%s881] ss:$9 sm:$0xff] %v631
        %896 = vst [vmem:[%s883] ss:$9 sm:$0xff] %v632
        %897 = vst [vmem:[%s885] ss:$9 sm:$0xff] %v633
        %898 = vst [vmem:[%s887] ss:$9 sm:$0xff] %v634
        %899 = vst [vmem:[%s889] ss:$9 sm:$0xff] %v635
        %v900 = vld [vmem:[#allocation1] sm:$0xff]
        %901 = vst [vmem:[#allocation1] ss:$9 sm:$0xff] %v636
        %902 = vst [vmem:[%s877] ss:$9 sm:$0xff] %v637
        %903 = vst [vmem:[%s879] ss:$9 sm:$0xff] %v638
        %904 = vst [vmem:[%s881] ss:$9 sm:$0xff] %v639
        %905 = vst [vmem:[%s883] ss:$9 sm:$0xff] %v640
        %906 = vst [vmem:[%s885] ss:$9 sm:$0xff] %v641
        %907 = vst [vmem:[%s887] ss:$9 sm:$0xff] %v642
        %908 = vst [vmem:[%s889] ss:$9 sm:$0xff] %v643
        %v909 = vld [vmem:[#allocation1] sm:$0xff]
        %910 = vst [vmem:[#allocation1] ss:$9 sm:$0xff] %v644
        %911 = vst [vmem:[%s877] ss:$9 sm:$0xff] %v645
        %912 = vst [vmem:[%s879] ss:$9 sm:$0xff] %v646
        %913 = vst [vmem:[%s881] ss:$9 sm:$0xff] %v647
        %914 = vst [vmem:[%s883] ss:$9 sm:$0xff] %v648
        %915 = vst [vmem:[%s885] ss:$9 sm:$0xff] %v649
        %916 = vst [vmem:[%s887] ss:$9 sm:$0xff] %v650
        %917 = vst [vmem:[%s889] ss:$9 sm:$0xff] %v651
        %v918 = vld [vmem:[#allocation1] sm:$0xff]
        %919 = vst [vmem:[#allocation1] ss:$9 sm:$0xff] %v652
        %920 = vst [vmem:[%s877] ss:$9 sm:$0xff] %v653
        %921 = vst [vmem:[%s879] ss:$9 sm:$0xff] %v654
        %922 = vst [vmem:[%s881] ss:$9 sm:$0xff] %v655
        %923 = vst [vmem:[%s883] ss:$9 sm:$0xff] %v656
        %924 = vst [vmem:[%s885] ss:$9 sm:$0xff] %v657
        %925 = vst [vmem:[%s887] ss:$9 sm:$0xff] %v658
        %926 = vst [vmem:[%s889] ss:$9 sm:$0xff] %v659
        %v927 = vld [vmem:[#allocation1] sm:$0xff]
        %928 = vst [vmem:[#allocation1] ss:$9 sm:$0xff] %v660
        %929 = vst [vmem:[%s877] ss:$9 sm:$0xff] %v661
        %930 = vst [vmem:[%s879] ss:$9 sm:$0xff] %v662
        %931 = vst [vmem:[%s881] ss:$9 sm:$0xff] %v663
        %932 = vst [vmem:[%s883] ss:$9 sm:$0xff] %v664
        %933 = vst [vmem:[%s885] ss:$9 sm:$0xff] %v665
        %934 = vst [vmem:[%s887] ss:$9 sm:$0xff] %v666
        %935 = vst [vmem:[%s889] ss:$9 sm:$0xff] %v667
        %v936 = vld [vmem:[#allocation1] sm:$0xff]
        %937 = vst [vmem:[#allocation1] ss:$9 sm:$0xff] %v668
        %938 = vst [vmem:[%s877] ss:$9 sm:$0xff] %v669
        %939 = vst [vmem:[%s879] ss:$9 sm:$0xff] %v670
        %940 = vst [vmem:[%s881] ss:$9 sm:$0xff] %v671
        %941 = vst [vmem:[%s883] ss:$9 sm:$0xff] %v672
        %942 = vst [vmem:[%s885] ss:$9 sm:$0xff] %v673
        %943 = vst [vmem:[%s887] ss:$9 sm:$0xff] %v674
        %944 = vst [vmem:[%s889] ss:$9 sm:$0xff] %v675
        %v945 = vld [vmem:[#allocation1] sm:$0xff]
        %946 = vst [vmem:[#allocation1] ss:$9 sm:$0xff] %v676
        %947 = vst [vmem:[%s877] ss:$9 sm:$0xff] %v677
        %948 = vst [vmem:[%s879] ss:$9 sm:$0xff] %v678
        %949 = vst [vmem:[%s881] ss:$9 sm:$0xff] %v679
        %950 = vst [vmem:[%s883] ss:$9 sm:$0xff] %v680
        %951 = vst [vmem:[%s885] ss:$9 sm:$0xff] %v681
        %952 = vst [vmem:[%s887] ss:$9 sm:$0xff] %v682
        %953 = vst [vmem:[%s889] ss:$9 sm:$0xff] %v683
        %v954 = vld [vmem:[#allocation1] sm:$0xff]
        %955 = vst [vmem:[#allocation1] ss:$9 sm:$0xff] %v684
        %956 = vst [vmem:[%s877] ss:$9 sm:$0xff] %v685
        %957 = vst [vmem:[%s879] ss:$9 sm:$0xff] %v686
        %958 = vst [vmem:[%s881] ss:$9 sm:$0xff] %v687
        %959 = vst [vmem:[%s883] ss:$9 sm:$0xff] %v688
        %960 = vst [vmem:[%s885] ss:$9 sm:$0xff] %v689
        %961 = vst [vmem:[%s887] ss:$9 sm:$0xff] %v690
        %962 = vst [vmem:[%s889] ss:$9 sm:$0xff] %v691
        %v963 = vld [vmem:[#allocation1] sm:$0xff]
        %964 = vst [vmem:[#allocation1] ss:$9 sm:$0xff] %v692
        %965 = vst [vmem:[%s877] ss:$9 sm:$0xff] %v693
        %966 = vst [vmem:[%s879] ss:$9 sm:$0xff] %v694
        %967 = vst [vmem:[%s881] ss:$9 sm:$0xff] %v695
        %968 = vst [vmem:[%s883] ss:$9 sm:$0xff] %v696
        %969 = vst [vmem:[%s885] ss:$9 sm:$0xff] %v697
        %970 = vst [vmem:[%s887] ss:$9 sm:$0xff] %v698
        %971 = vst [vmem:[%s889] ss:$9 sm:$0xff] %v699
        %v972 = vld [vmem:[#allocation1] sm:$0xff]
        %973 = vst [vmem:[#allocation1] ss:$9 sm:$0xff] %v700
        %974 = vst [vmem:[%s877] ss:$9 sm:$0xff] %v701
        %975 = vst [vmem:[%s879] ss:$9 sm:$0xff] %v702
        %976 = vst [vmem:[%s881] ss:$9 sm:$0xff] %v703
        %977 = vst [vmem:[%s883] ss:$9 sm:$0xff] %v704
        %978 = vst [vmem:[%s885] ss:$9 sm:$0xff] %v705
        %979 = vst [vmem:[%s887] ss:$9 sm:$0xff] %v706
        %980 = vst [vmem:[%s889] ss:$9 sm:$0xff] %v707
        %v981 = vld [vmem:[#allocation1] sm:$0xff]
        %982 = vst [vmem:[#allocation1] ss:$9 sm:$0xff] %v708
        %983 = vst [vmem:[%s877] ss:$9 sm:$0xff] %v709
        %984 = vst [vmem:[%s879] ss:$9 sm:$0xff] %v710
        %985 = vst [vmem:[%s881] ss:$9 sm:$0xff] %v711
        %986 = vst [vmem:[%s883] ss:$9 sm:$0xff] %v712
        %987 = vst [vmem:[%s885] ss:$9 sm:$0xff] %v713
        %988 = vst [vmem:[%s887] ss:$9 sm:$0xff] %v714
        %989 = vst [vmem:[%s889] ss:$9 sm:$0xff] %v715
        %v990 = vld [vmem:[#allocation1] sm:$0xff]
        %991 = vst [vmem:[#allocation1] ss:$9 sm:$0xff] %v716
        %992 = vst [vmem:[%s877] ss:$9 sm:$0xff] %v717
        %993 = vst [vmem:[%s879] ss:$9 sm:$0xff] %v718
        %994 = vst [vmem:[%s881] ss:$9 sm:$0xff] %v719
        %995 = vst [vmem:[%s883] ss:$9 sm:$0xff] %v720
        %996 = vst [vmem:[%s885] ss:$9 sm:$0xff] %v721
        %997 = vst [vmem:[%s887] ss:$9 sm:$0xff] %v722
        %998 = vst [vmem:[%s889] ss:$9 sm:$0xff] %v723
        %v999 = vld [vmem:[#allocation1] sm:$0xff]
        %1000 = vst [vmem:[#allocation1] ss:$9 sm:$0xff] %v724
        %1001 = vst [vmem:[%s877] ss:$9 sm:$0xff] %v725
        %1002 = vst [vmem:[%s879] ss:$9 sm:$0xff] %v726
        %1003 = vst [vmem:[%s881] ss:$9 sm:$0xff] %v727
        %1004 = vst [vmem:[%s883] ss:$9 sm:$0xff] %v728
        %1005 = vst [vmem:[%s885] ss:$9 sm:$0xff] %v729
        %1006 = vst [vmem:[%s887] ss:$9 sm:$0xff] %v730
        %1007 = vst [vmem:[%s889] ss:$9 sm:$0xff] %v731
        %v1008 = vld [vmem:[#allocation1] sm:$0xff]
        %1009 = vst [vmem:[#allocation1] ss:$9 sm:$0xff] %v732
        %1010 = vst [vmem:[%s877] ss:$9 sm:$0xff] %v733
        %1011 = vst [vmem:[%s879] ss:$9 sm:$0xff] %v734
        %1012 = vst [vmem:[%s881] ss:$9 sm:$0xff] %v735
        %1013 = vst [vmem:[%s883] ss:$9 sm:$0xff] %v736
        %1014 = vst [vmem:[%s885] ss:$9 sm:$0xff] %v737
        %1015 = vst [vmem:[%s887] ss:$9 sm:$0xff] %v738
        %1016 = vst [vmem:[%s889] ss:$9 sm:$0xff] %v739
        %v1017 = vld [vmem:[#allocation1] sm:$0xff]
        %1018 = vst [vmem:[#allocation1] ss:$9 sm:$0xff] %v740
        %1019 = vst [vmem:[%s877] ss:$9 sm:$0xff] %v741
        %1020 = vst [vmem:[%s879] ss:$9 sm:$0xff] %v742
        %1021 = vst [vmem:[%s881] ss:$9 sm:$0xff] %v743
        %1022 = vst [vmem:[%s883] ss:$9 sm:$0xff] %v744
        %1023 = vst [vmem:[%s885] ss:$9 sm:$0xff] %v745
        %1024 = vst [vmem:[%s887] ss:$9 sm:$0xff] %v746
        %1025 = vst [vmem:[%s889] ss:$9 sm:$0xff] %v747
        %v1026 = vld [vmem:[#allocation1] sm:$0xff]
        %1027 = vst [vmem:[#allocation1] ss:$9 sm:$0xff] %v748
        %1028 = vst [vmem:[%s877] ss:$9 sm:$0xff] %v749
        %1029 = vst [vmem:[%s879] ss:$9 sm:$0xff] %v750
        %1030 = vst [vmem:[%s881] ss:$9 sm:$0xff] %v751
        %1031 = vst [vmem:[%s883] ss:$9 sm:$0xff] %v752
        %1032 = vst [vmem:[%s885] ss:$9 sm:$0xff] %v753
        %1033 = vst [vmem:[%s887] ss:$9 sm:$0xff] %v754
        %1034 = vst [vmem:[%s889] ss:$9 sm:$0xff] %v755
        %v1035 = vld [vmem:[#allocation1] sm:$0xff]
        %1036 = vst [vmem:[#allocation1] ss:$9 sm:$0xff] %v756
        %1037 = vst [vmem:[%s877] ss:$9 sm:$0xff] %v757
        %1038 = vst [vmem:[%s879] ss:$9 sm:$0xff] %v758
        %1039 = vst [vmem:[%s881] ss:$9 sm:$0xff] %v759
        %1040 = vst [vmem:[%s883] ss:$9 sm:$0xff] %v760
        %1041 = vst [vmem:[%s885] ss:$9 sm:$0xff] %v761
        %1042 = vst [vmem:[%s887] ss:$9 sm:$0xff] %v762
        %1043 = vst [vmem:[%s889] ss:$9 sm:$0xff] %v763
        %v1044 = vld [vmem:[#allocation1] sm:$0xff]
        %1045 = vst [vmem:[#allocation1] ss:$9 sm:$0xff] %v764
        %1046 = vst [vmem:[%s877] ss:$9 sm:$0xff] %v765
        %1047 = vst [vmem:[%s879] ss:$9 sm:$0xff] %v766
        %1048 = vst [vmem:[%s881] ss:$9 sm:$0xff] %v767
        %1049 = vst [vmem:[%s883] ss:$9 sm:$0xff] %v768
        %1050 = vst [vmem:[%s885] ss:$9 sm:$0xff] %v769
        %1051 = vst [vmem:[%s887] ss:$9 sm:$0xff] %v770
        %1052 = vst [vmem:[%s889] ss:$9 sm:$0xff] %v771
        %v1053 = vld [vmem:[#allocation1] sm:$0xff]
        %1054 = vst [vmem:[#allocation1] ss:$9 sm:$0xff] %v772
        %1055 = vst [vmem:[%s877] ss:$9 sm:$0xff] %v773
        %1056 = vst [vmem:[%s879] ss:$9 sm:$0xff] %v774
        %1057 = vst [vmem:[%s881] ss:$9 sm:$0xff] %v775
        %1058 = vst [vmem:[%s883] ss:$9 sm:$0xff] %v776
        %1059 = vst [vmem:[%s885] ss:$9 sm:$0xff] %v777
        %1060 = vst [vmem:[%s887] ss:$9 sm:$0xff] %v778
        %1061 = vst [vmem:[%s889] ss:$9 sm:$0xff] %v779
        %v1062 = vld [vmem:[#allocation1] sm:$0xff]
        %1063 = vst [vmem:[#allocation1] ss:$9 sm:$0xff] %v780
        %1064 = vst [vmem:[%s877] ss:$9 sm:$0xff] %v781
        %1065 = vst [vmem:[%s879] ss:$9 sm:$0xff] %v782
        %1066 = vst [vmem:[%s881] ss:$9 sm:$0xff] %v783
        %1067 = vst [vmem:[%s883] ss:$9 sm:$0xff] %v784
        %1068 = vst [vmem:[%s885] ss:$9 sm:$0xff] %v785
        %1069 = vst [vmem:[%s887] ss:$9 sm:$0xff] %v786
        %1070 = vst [vmem:[%s889] ss:$9 sm:$0xff] %v787
        %v1071 = vld [vmem:[#allocation1] sm:$0xff]
        %1072 = vst [vmem:[#allocation1] ss:$9 sm:$0xff] %v788
        %1073 = vst [vmem:[%s877] ss:$9 sm:$0xff] %v789
        %1074 = vst [vmem:[%s879] ss:$9 sm:$0xff] %v790
        %1075 = vst [vmem:[%s881] ss:$9 sm:$0xff] %v791
        %1076 = vst [vmem:[%s883] ss:$9 sm:$0xff] %v792
        %1077 = vst [vmem:[%s885] ss:$9 sm:$0xff] %v793
        %1078 = vst [vmem:[%s887] ss:$9 sm:$0xff] %v794
        %1079 = vst [vmem:[%s889] ss:$9 sm:$0xff] %v795
        %v1080 = vld [vmem:[#allocation1] sm:$0xff]
        %1081 = vst [vmem:[#allocation1] ss:$9 sm:$0xff] %v796
        %1082 = vst [vmem:[%s877] ss:$9 sm:$0xff] %v797
        %1083 = vst [vmem:[%s879] ss:$9 sm:$0xff] %v798
        %1084 = vst [vmem:[%s881] ss:$9 sm:$0xff] %v799
        %1085 = vst [vmem:[%s883] ss:$9 sm:$0xff] %v800
        %1086 = vst [vmem:[%s885] ss:$9 sm:$0xff] %v801
        %1087 = vst [vmem:[%s887] ss:$9 sm:$0xff] %v802
        %1088 = vst [vmem:[%s889] ss:$9 sm:$0xff] %v803
        %v1089 = vld [vmem:[#allocation1] sm:$0xff]
        %1090 = vst [vmem:[#allocation1] ss:$9 sm:$0xff] %v804
        %1091 = vst [vmem:[%s877] ss:$9 sm:$0xff] %v805
        %1092 = vst [vmem:[%s879] ss:$9 sm:$0xff] %v806
        %1093 = vst [vmem:[%s881] ss:$9 sm:$0xff] %v807
        %1094 = vst [vmem:[%s883] ss:$9 sm:$0xff] %v808
        %1095 = vst [vmem:[%s885] ss:$9 sm:$0xff] %v809
        %1096 = vst [vmem:[%s887] ss:$9 sm:$0xff] %v810
        %1097 = vst [vmem:[%s889] ss:$9 sm:$0xff] %v811
        %v1098 = vld [vmem:[#allocation1] sm:$0xff]
        %1099 = vst [vmem:[#allocation1] ss:$9 sm:$0xff] %v812
        %1100 = vst [vmem:[%s877] ss:$9 sm:$0xff] %v813
        %1101 = vst [vmem:[%s879] ss:$9 sm:$0xff] %v814
        %1102 = vst [vmem:[%s881] ss:$9 sm:$0xff] %v815
        %1103 = vst [vmem:[%s883] ss:$9 sm:$0xff] %v816
        %1104 = vst [vmem:[%s885] ss:$9 sm:$0xff] %v817
        %1105 = vst [vmem:[%s887] ss:$9 sm:$0xff] %v818
        %1106 = vst [vmem:[%s889] ss:$9 sm:$0xff] %v819
        %v1107 = vld [vmem:[#allocation1] sm:$0xff]
        %1108 = vst [vmem:[#allocation1] ss:$9 sm:$0xff] %v820
        %1109 = vst [vmem:[%s877] ss:$9 sm:$0xff] %v821
        %1110 = vst [vmem:[%s879] ss:$9 sm:$0xff] %v822
        %1111 = vst [vmem:[%s881] ss:$9 sm:$0xff] %v823
        %1112 = vst [vmem:[%s883] ss:$9 sm:$0xff] %v824
        %1113 = vst [vmem:[%s885] ss:$9 sm:$0xff] %v825
        %1114 = vst [vmem:[%s887] ss:$9 sm:$0xff] %v826
        %1115 = vst [vmem:[%s889] ss:$9 sm:$0xff] %v827
        %v1116 = vld [vmem:[#allocation1] sm:$0xff]
        %1117 = vst [vmem:[#allocation1] ss:$9 sm:$0xff] %v828
        %1118 = vst [vmem:[%s877] ss:$9 sm:$0xff] %v829
        %1119 = vst [vmem:[%s879] ss:$9 sm:$0xff] %v830
        %1120 = vst [vmem:[%s881] ss:$9 sm:$0xff] %v831
        %1121 = vst [vmem:[%s883] ss:$9 sm:$0xff] %v832
        %1122 = vst [vmem:[%s885] ss:$9 sm:$0xff] %v833
        %1123 = vst [vmem:[%s887] ss:$9 sm:$0xff] %v834
        %1124 = vst [vmem:[%s889] ss:$9 sm:$0xff] %v835
        %v1125 = vld [vmem:[#allocation1] sm:$0xff]
        %1126 = vst [vmem:[#allocation1] ss:$9 sm:$0xff] %v836
        %1127 = vst [vmem:[%s877] ss:$9 sm:$0xff] %v837
        %1128 = vst [vmem:[%s879] ss:$9 sm:$0xff] %v838
        %1129 = vst [vmem:[%s881] ss:$9 sm:$0xff] %v839
        %1130 = vst [vmem:[%s883] ss:$9 sm:$0xff] %v840
        %1131 = vst [vmem:[%s885] ss:$9 sm:$0xff] %v841
        %1132 = vst [vmem:[%s887] ss:$9 sm:$0xff] %v842
        %1133 = vst [vmem:[%s889] ss:$9 sm:$0xff] %v843
        %v1134 = vld [vmem:[#allocation1] sm:$0xff]
        %1135 = vst [vmem:[#allocation1] ss:$9 sm:$0xff] %v844
        %1136 = vst [vmem:[%s877] ss:$9 sm:$0xff] %v845
        %1137 = vst [vmem:[%s879] ss:$9 sm:$0xff] %v846
        %1138 = vst [vmem:[%s881] ss:$9 sm:$0xff] %v847
        %1139 = vst [vmem:[%s883] ss:$9 sm:$0xff] %v848
        %1140 = vst [vmem:[%s885] ss:$9 sm:$0xff] %v849
        %1141 = vst [vmem:[%s887] ss:$9 sm:$0xff] %v850
        %1142 = vst [vmem:[%s889] ss:$9 sm:$0xff] %v851
        %v1143 = vld [vmem:[#allocation1] sm:$0xff]
        %1144 = vst [vmem:[#allocation1] ss:$9 sm:$0xff] %v852
        %1145 = vst [vmem:[%s877] ss:$9 sm:$0xff] %v853
        %1146 = vst [vmem:[%s879] ss:$9 sm:$0xff] %v854
        %1147 = vst [vmem:[%s881] ss:$9 sm:$0xff] %v855
        %1148 = vst [vmem:[%s883] ss:$9 sm:$0xff] %v856
        %1149 = vst [vmem:[%s885] ss:$9 sm:$0xff] %v857
        %1150 = vst [vmem:[%s887] ss:$9 sm:$0xff] %v858
        %1151 = vst [vmem:[%s889] ss:$9 sm:$0xff] %v859
        %v1152 = vld [vmem:[#allocation1] sm:$0xff]
        %1153 = vst [vmem:[#allocation1] ss:$9 sm:$0xff] %v860
        %1154 = vst [vmem:[%s877] ss:$9 sm:$0xff] %v861
        %1155 = vst [vmem:[%s879] ss:$9 sm:$0xff] %v862
        %1156 = vst [vmem:[%s881] ss:$9 sm:$0xff] %v863
        %1157 = vst [vmem:[%s883] ss:$9 sm:$0xff] %v864
        %1158 = vst [vmem:[%s885] ss:$9 sm:$0xff] %v865
        %1159 = vst [vmem:[%s887] ss:$9 sm:$0xff] %v866
        %1160 = vst [vmem:[%s889] ss:$9 sm:$0xff] %v867
        %v1161 = vld [vmem:[#allocation1] sm:$0xff]
        %1162 = vst [vmem:[#allocation1] ss:$9 sm:$0xff] %v868
        %1163 = vst [vmem:[%s877] ss:$9 sm:$0xff] %v869
        %1164 = vst [vmem:[%s879] ss:$9 sm:$0xff] %v870
        %1165 = vst [vmem:[%s881] ss:$9 sm:$0xff] %v871
        %1166 = vst [vmem:[%s883] ss:$9 sm:$0xff] %v872
        %1167 = vst [vmem:[%s885] ss:$9 sm:$0xff] %v873
        %1168 = vst [vmem:[%s887] ss:$9 sm:$0xff] %v874
        %1169 = vst [vmem:[%s889] ss:$9 sm:$0xff] %v875
        %v1170 = vld [vmem:[#allocation1] sm:$0xff]
        %1171 = vset.pattern.permute.xlu0 0
        %1172 = vperm.xlu0 %1171, %v891
        %v1173 = vpop.permute.xlu0 %1172
        %1174 = vset.pattern.permute.xlu0 0
        %1175 = vperm.xlu0 %1174, %v900
        %v1176 = vpop.permute.xlu0 %1175
        %1177 = vset.pattern.permute.xlu0 0
        %1178 = vperm.xlu0 %1177, %v909
        %v1179 = vpop.permute.xlu0 %1178
        %1180 = vset.pattern.permute.xlu0 0
        %1181 = vperm.xlu0 %1180, %v918
        %v1182 = vpop.permute.xlu0 %1181
        %1183 = vset.pattern.permute.xlu0 0
        %1184 = vperm.xlu0 %1183, %v927
        %v1185 = vpop.permute.xlu0 %1184
        %1186 = vset.pattern.permute.xlu0 0
        %1187 = vperm.xlu0 %1186, %v936
        %v1188 = vpop.permute.xlu0 %1187
        %1189 = vset.pattern.permute.xlu0 0
        %1190 = vperm.xlu0 %1189, %v945
        %v1191 = vpop.permute.xlu0 %1190
        %1192 = vset.pattern.permute.xlu0 0
        %1193 = vperm.xlu0 %1192, %v954
        %v1194 = vpop.permute.xlu0 %1193
        %1195 = vset.pattern.permute.xlu0 0
        %1196 = vperm.xlu0 %1195, %v963
        %v1197 = vpop.permute.xlu0 %1196
        %1198 = vset.pattern.permute.xlu0 0
        %1199 = vperm.xlu0 %1198, %v972
        %v1200 = vpop.permute.xlu0 %1199
        %1201 = vset.pattern.permute.xlu0 0
        %1202 = vperm.xlu0 %1201, %v981
        %v1203 = vpop.permute.xlu0 %1202
        %1204 = vset.pattern.permute.xlu0 0
        %1205 = vperm.xlu0 %1204, %v990
        %v1206 = vpop.permute.xlu0 %1205
        %1207 = vset.pattern.permute.xlu0 0
        %1208 = vperm.xlu0 %1207, %v999
        %v1209 = vpop.permute.xlu0 %1208
        %1210 = vset.pattern.permute.xlu0 0
        %1211 = vperm.xlu0 %1210, %v1008
        %v1212 = vpop.permute.xlu0 %1211
        %1213 = vset.pattern.permute.xlu0 0
        %1214 = vperm.xlu0 %1213, %v1017
        %v1215 = vpop.permute.xlu0 %1214
        %1216 = vset.pattern.permute.xlu0 0
        %1217 = vperm.xlu0 %1216, %v1026
        %v1218 = vpop.permute.xlu0 %1217
        %1219 = vset.pattern.permute.xlu0 0
        %1220 = vperm.xlu0 %1219, %v1035
        %v1221 = vpop.permute.xlu0 %1220
        %1222 = vset.pattern.permute.xlu0 0
        %1223 = vperm.xlu0 %1222, %v1044
        %v1224 = vpop.permute.xlu0 %1223
        %1225 = vset.pattern.permute.xlu0 0
        %1226 = vperm.xlu0 %1225, %v1053
        %v1227 = vpop.permute.xlu0 %1226
        %1228 = vset.pattern.permute.xlu0 0
        %1229 = vperm.xlu0 %1228, %v1062
        %v1230 = vpop.permute.xlu0 %1229
        %1231 = vset.pattern.permute.xlu0 0
        %1232 = vperm.xlu0 %1231, %v1071
        %v1233 = vpop.permute.xlu0 %1232
        %1234 = vset.pattern.permute.xlu0 0
        %1235 = vperm.xlu0 %1234, %v1080
        %v1236 = vpop.permute.xlu0 %1235
        %1237 = vset.pattern.permute.xlu0 0
        %1238 = vperm.xlu0 %1237, %v1089
        %v1239 = vpop.permute.xlu0 %1238
        %1240 = vset.pattern.permute.xlu0 0
        %1241 = vperm.xlu0 %1240, %v1098
        %v1242 = vpop.permute.xlu0 %1241
        %1243 = vset.pattern.permute.xlu0 0
        %1244 = vperm.xlu0 %1243, %v1107
        %v1245 = vpop.permute.xlu0 %1244
        %1246 = vset.pattern.permute.xlu0 0
        %1247 = vperm.xlu0 %1246, %v1116
        %v1248 = vpop.permute.xlu0 %1247
        %1249 = vset.pattern.permute.xlu0 0
        %1250 = vperm.xlu0 %1249, %v1125
        %v1251 = vpop.permute.xlu0 %1250
        %1252 = vset.pattern.permute.xlu0 0
        %1253 = vperm.xlu0 %1252, %v1134
        %v1254 = vpop.permute.xlu0 %1253
        %1255 = vset.pattern.permute.xlu0 0
        %1256 = vperm.xlu0 %1255, %v1143
        %v1257 = vpop.permute.xlu0 %1256
        %1258 = vset.pattern.permute.xlu0 0
        %1259 = vperm.xlu0 %1258, %v1152
        %v1260 = vpop.permute.xlu0 %1259
        %1261 = vset.pattern.permute.xlu0 0
        %1262 = vperm.xlu0 %1261, %v1161
        %v1263 = vpop.permute.xlu0 %1262
        %1264 = vset.pattern.permute.xlu0 0
        %1265 = vperm.xlu0 %1264, %v1170
        %v1266 = vpop.permute.xlu0 %1265
        %v1267 = vlaneseq
        %v1268 = vand.u32 %v1267, 127
        %v1269 = vperm.slane %v1173, %v1268
        %v1270 = vadd.s32 %v1268, 4294967288
        %v1271 = vperm.slane %v1176, %v1270
        %vm1272 = vcmask 130112
        %v1273 = vsel %vm1272, %v1271, %v1269
        %v1274 = vadd.s32 %v1268, 4294967280
        %v1275 = vperm.slane %v1179, %v1274
        %vm1276 = vcmask 195712
        %v1277 = vsel %vm1276, %v1275, %v1273
        %v1278 = vadd.s32 %v1268, 4294967272
        %v1279 = vperm.slane %v1182, %v1278
        %vm1280 = vcmask 261312
        %v1281 = vsel %vm1280, %v1279, %v1277
        %v1282 = vadd.s32 %v1268, 4294967264
        %v1283 = vperm.slane %v1185, %v1282
        %vm1284 = vcmask 326912
        %v1285 = vsel %vm1284, %v1283, %v1281
        %v1286 = vadd.s32 %v1268, 4294967256
        %v1287 = vperm.slane %v1188, %v1286
        %vm1288 = vcmask 392512
        %v1289 = vsel %vm1288, %v1287, %v1285
        %v1290 = vadd.s32 %v1268, 4294967248
        %v1291 = vperm.slane %v1191, %v1290
        %vm1292 = vcmask 458112
        %v1293 = vsel %vm1292, %v1291, %v1289
        %v1294 = vadd.s32 %v1268, 4294967240
        %v1295 = vperm.slane %v1194, %v1294
        %vm1296 = vcmask 523712
        %v1297 = vsel %vm1296, %v1295, %v1293
        %v1298 = vadd.s32 %v1268, 4294967232
        %v1299 = vperm.slane %v1197, %v1298
        %vm1300 = vcmask 589312
        %v1301 = vsel %vm1300, %v1299, %v1297
        %v1302 = vadd.s32 %v1268, 4294967224
        %v1303 = vperm.slane %v1200, %v1302
        %vm1304 = vcmask 654912
        %v1305 = vsel %vm1304, %v1303, %v1301
        %v1306 = vadd.s32 %v1268, 4294967216
        %v1307 = vperm.slane %v1203, %v1306
        %vm1308 = vcmask 720512
        %v1309 = vsel %vm1308, %v1307, %v1305
        %v1310 = vadd.s32 %v1268, 4294967208
        %v1311 = vperm.slane %v1206, %v1310
        %vm1312 = vcmask 786112
        %v1313 = vsel %vm1312, %v1311, %v1309
        %v1314 = vadd.s32 %v1268, 4294967200
        %v1315 = vperm.slane %v1209, %v1314
        %vm1316 = vcmask 851712
        %v1317 = vsel %vm1316, %v1315, %v1313
        %v1318 = vadd.s32 %v1268, 4294967192
        %v1319 = vperm.slane %v1212, %v1318
        %vm1320 = vcmask 917312
        %v1321 = vsel %vm1320, %v1319, %v1317
        %v1322 = vadd.s32 %v1268, 4294967184
        %v1323 = vperm.slane %v1215, %v1322
        %vm1324 = vcmask 982912
        %v1325 = vsel %vm1324, %v1323, %v1321
        %v1326 = vadd.s32 %v1268, 4294967176
        %v1327 = vperm.slane %v1218, %v1326
        %vm1328 = vcmask 1048512
        %v1329 = vsel %vm1328, %v1327, %v1325
        %v1330 = vperm.slane %v1221, %v1268
        %v1331 = vperm.slane %v1224, %v1270
        %v1332 = vsel %vm1272, %v1331, %v1330
        %v1333 = vperm.slane %v1227, %v1274
        %v1334 = vsel %vm1276, %v1333, %v1332
        %v1335 = vperm.slane %v1230, %v1278
        %v1336 = vsel %vm1280, %v1335, %v1334
        %v1337 = vperm.slane %v1233, %v1282
        %v1338 = vsel %vm1284, %v1337, %v1336
        %v1339 = vperm.slane %v1236, %v1286
        %v1340 = vsel %vm1288, %v1339, %v1338
        %v1341 = vperm.slane %v1239, %v1290
        %v1342 = vsel %vm1292, %v1341, %v1340
        %v1343 = vperm.slane %v1242, %v1294
        %v1344 = vsel %vm1296, %v1343, %v1342
        %v1345 = vperm.slane %v1245, %v1298
        %v1346 = vsel %vm1300, %v1345, %v1344
        %v1347 = vperm.slane %v1248, %v1302
        %v1348 = vsel %vm1304, %v1347, %v1346
        %v1349 = vperm.slane %v1251, %v1306
        %v1350 = vsel %vm1308, %v1349, %v1348
        %v1351 = vperm.slane %v1254, %v1310
        %v1352 = vsel %vm1312, %v1351, %v1350
        %v1353 = vperm.slane %v1257, %v1314
        %v1354 = vsel %vm1316, %v1353, %v1352
        %v1355 = vperm.slane %v1260, %v1318
        %v1356 = vsel %vm1320, %v1355, %v1354
        %v1357 = vperm.slane %v1263, %v1322
        %v1358 = vsel %vm1324, %v1357, %v1356
        %v1359 = vperm.slane %v1266, %v1326
        %v1360 = vsel %vm1328, %v1359, %v1358
        %v1361 = vrot.slane %v1360, 7
        %vm1362 = vcmask 1040384
        %v1363 = vsel %vm1362, %v1329, %v1361
        %v1364 = vlaneseq
        %vm1365 = vcmp.ge.s32.totalorder %v1364, 0
        %vm1366 = vcmp.lt.s32.totalorder %v1364, 256
        %vm1367 = vmand %vm1365, %vm1366
        %1368 = vst.msk [vmem:[%s199] sm:$0x3] %vm1367, %v1363
        %vm1369 = vcmp.eq.s32.totalorder %v1268, %v526
        %vm1370 = vcmp.eq.s32.totalorder %v1268, %v529
        %vm1371 = vcmp.eq.s32.totalorder %v1268, %v532
        %vm1372 = vcmp.eq.s32.totalorder %v1268, %v535
        %vm1373 = vcmp.eq.s32.totalorder %v1268, %v538
        %vm1374 = vcmp.eq.s32.totalorder %v1268, %v541
        %vm1375 = vcmp.eq.s32.totalorder %v1268, %v544
        %vm1376 = vcmp.eq.s32.totalorder %v1268, %v547
        %vm1377 = vcmp.eq.s32.totalorder %v1268, %v550
        %vm1378 = vcmp.eq.s32.totalorder %v1268, %v553
        %vm1379 = vcmp.eq.s32.totalorder %v1268, %v556
        %vm1380 = vcmp.eq.s32.totalorder %v1268, %v559
        %vm1381 = vcmp.eq.s32.totalorder %v1268, %v562
        %vm1382 = vcmp.eq.s32.totalorder %v1268, %v565
        %vm1383 = vcmp.eq.s32.totalorder %v1268, %v568
        %vm1384 = vcmp.eq.s32.totalorder %v1268, %v571
        %vm1385 = vcmp.eq.s32.totalorder %v1268, %v574
        %vm1386 = vcmp.eq.s32.totalorder %v1268, %v577
        %vm1387 = vcmp.eq.s32.totalorder %v1268, %v580
        %vm1388 = vcmp.eq.s32.totalorder %v1268, %v583
        %vm1389 = vcmp.eq.s32.totalorder %v1268, %v586
        %vm1390 = vcmp.eq.s32.totalorder %v1268, %v589
        %vm1391 = vcmp.eq.s32.totalorder %v1268, %v592
        %vm1392 = vcmp.eq.s32.totalorder %v1268, %v595
        %vm1393 = vcmp.eq.s32.totalorder %v1268, %v598
        %vm1394 = vcmp.eq.s32.totalorder %v1268, %v601
        %vm1395 = vcmp.eq.s32.totalorder %v1268, %v604
        %vm1396 = vcmp.eq.s32.totalorder %v1268, %v607
        %vm1397 = vcmp.eq.s32.totalorder %v1268, %v610
        %vm1398 = vcmp.eq.s32.totalorder %v1268, %v613
        %vm1399 = vcmp.eq.s32.totalorder %v1268, %v616
        %vm1400 = vcmp.eq.s32.totalorder %v1268, %v619
        %v1401 = vsel %vm1369, 1, 0
        %v1402 = vsel %vm1370, 1, 0
        %v1403 = vsel %vm1371, 1, 0
        %v1404 = vsel %vm1372, 1, 0
        %v1405 = vsel %vm1373, 1, 0
        %v1406 = vsel %vm1374, 1, 0
        %v1407 = vsel %vm1375, 1, 0
        %v1408 = vsel %vm1376, 1, 0
        %v1409 = vsel %vm1377, 1, 0
        %v1410 = vsel %vm1378, 1, 0
        %v1411 = vsel %vm1379, 1, 0
        %v1412 = vsel %vm1380, 1, 0
        %v1413 = vsel %vm1381, 1, 0
        %v1414 = vsel %vm1382, 1, 0
        %v1415 = vsel %vm1383, 1, 0
        %v1416 = vsel %vm1384, 1, 0
        %v1417 = vsel %vm1385, 1, 0
        %v1418 = vsel %vm1386, 1, 0
        %v1419 = vsel %vm1387, 1, 0
        %v1420 = vsel %vm1388, 1, 0
        %v1421 = vsel %vm1389, 1, 0
        %v1422 = vsel %vm1390, 1, 0
        %v1423 = vsel %vm1391, 1, 0
        %v1424 = vsel %vm1392, 1, 0
        %v1425 = vsel %vm1393, 1, 0
        %v1426 = vsel %vm1394, 1, 0
        %v1427 = vsel %vm1395, 1, 0
        %v1428 = vsel %vm1396, 1, 0
        %v1429 = vsel %vm1397, 1, 0
        %v1430 = vsel %vm1398, 1, 0
        %v1431 = vsel %vm1399, 1, 0
        %v1432 = vsel %vm1400, 1, 0
        %v1433 = vcvt.s32.f32 %v1401
        %v1434 = vcvt.s32.f32 %v1402
        %v1435 = vcvt.s32.f32 %v1403
        %v1436 = vcvt.s32.f32 %v1404
        %v1437 = vcvt.s32.f32 %v1405
        %v1438 = vcvt.s32.f32 %v1406
        %v1439 = vcvt.s32.f32 %v1407
        %v1440 = vcvt.s32.f32 %v1408
        %v1441 = vcvt.s32.f32 %v1409
        %v1442 = vcvt.s32.f32 %v1410
        %v1443 = vcvt.s32.f32 %v1411
        %v1444 = vcvt.s32.f32 %v1412
        %v1445 = vcvt.s32.f32 %v1413
        %v1446 = vcvt.s32.f32 %v1414
        %v1447 = vcvt.s32.f32 %v1415
        %v1448 = vcvt.s32.f32 %v1416
        %v1449 = vcvt.s32.f32 %v1417
        %v1450 = vcvt.s32.f32 %v1418
        %v1451 = vcvt.s32.f32 %v1419
        %v1452 = vcvt.s32.f32 %v1420
        %v1453 = vcvt.s32.f32 %v1421
        %v1454 = vcvt.s32.f32 %v1422
        %v1455 = vcvt.s32.f32 %v1423
        %v1456 = vcvt.s32.f32 %v1424
        %v1457 = vcvt.s32.f32 %v1425
        %v1458 = vcvt.s32.f32 %v1426
        %v1459 = vcvt.s32.f32 %v1427
        %v1460 = vcvt.s32.f32 %v1428
        %v1461 = vcvt.s32.f32 %v1429
        %v1462 = vcvt.s32.f32 %v1430
        %v1463 = vcvt.s32.f32 %v1431
        %v1464 = vcvt.s32.f32 %v1432
        %v1466 = vsel %vm523, %v1433, 0
        %v1469 = vsel %vm523, %v1434, 0
        %v1472 = vsel %vm523, %v1435, 0
        %v1475 = vsel %vm523, %v1436, 0
        %v1478 = vsel %vm523, %v1437, 0
        %v1481 = vsel %vm523, %v1438, 0
        %v1484 = vsel %vm523, %v1439, 0
        %v1487 = vsel %vm523, %v1440, 0
        %v1490 = vsel %vm523, %v1441, 0
        %v1493 = vsel %vm523, %v1442, 0
        %v1496 = vsel %vm523, %v1443, 0
        %v1499 = vsel %vm523, %v1444, 0
        %v1502 = vsel %vm523, %v1445, 0
        %v1505 = vsel %vm523, %v1446, 0
        %v1508 = vsel %vm523, %v1447, 0
        %v1511 = vsel %vm523, %v1448, 0
        %v1514 = vsel %vm523, %v1449, 0
        %v1517 = vsel %vm523, %v1450, 0
        %v1520 = vsel %vm523, %v1451, 0
        %v1523 = vsel %vm523, %v1452, 0
        %v1526 = vsel %vm523, %v1453, 0
        %v1529 = vsel %vm523, %v1454, 0
        %v1532 = vsel %vm523, %v1455, 0
        %v1535 = vsel %vm523, %v1456, 0
        %v1538 = vsel %vm523, %v1457, 0
        %v1541 = vsel %vm523, %v1458, 0
        %v1544 = vsel %vm523, %v1459, 0
        %v1547 = vsel %vm523, %v1460, 0
        %v1550 = vsel %vm523, %v1461, 0
        %v1553 = vsel %vm523, %v1462, 0
        %v1556 = vsel %vm523, %v1463, 0
        %v1559 = vsel %vm523, %v1464, 0
        %1561 = vmatpush.msra.mxu0 0.0
        %1562 = vmatpush.msra.mxu0 0.0
        %1563 = vmatpush.msra.mxu0 0.0
        %1564 = vmatpush.msra.mxu0 0.0
        %1565 = vmatpush.msra.mxu0 0.0
        %1566 = vmatpush.msra.mxu0 0.0
        %1567 = vmatpush.msra.mxu0 0.0
        %1568 = vmatpush.msra.mxu0 0.0
        %1569 = vmatpush.msra.mxu0 %v252
        %1570 = vmatpush.msra.mxu0 %v251
        %1571 = vmatpush.msra.mxu0 %v250
        %1572 = vmatpush.msra.mxu0 %v249
        %1573 = vmatpush.msra.mxu0 %v248
        %1574 = vmatpush.msra.mxu0 %v247
        %1575 = vmatpush.msra.mxu0 %v246
        %1576 = vmatpush.msra.mxu0 %v245
        %1577 = vmatmul.f32.gmra.mxu0 %v1466
        %v1578 = vpop.f32.mrf.mxu0
        %v1579 = vadd.f32 0.0, %v1578
        %1580 = vmatmul.f32.gmra.mxu0 %v1469
        %v1581 = vpop.f32.mrf.mxu0
        %v1582 = vadd.f32 0.0, %v1581
        %1583 = vmatmul.f32.gmra.mxu0 %v1472
        %v1584 = vpop.f32.mrf.mxu0
        %v1585 = vadd.f32 0.0, %v1584
        %1586 = vmatmul.f32.gmra.mxu0 %v1475
        %v1587 = vpop.f32.mrf.mxu0
        %v1588 = vadd.f32 0.0, %v1587
        %1589 = vmatmul.f32.gmra.mxu0 %v1478
        %v1590 = vpop.f32.mrf.mxu0
        %v1591 = vadd.f32 0.0, %v1590
        %1592 = vmatmul.f32.gmra.mxu0 %v1481
        %v1593 = vpop.f32.mrf.mxu0
        %v1594 = vadd.f32 0.0, %v1593
        %1595 = vmatmul.f32.gmra.mxu0 %v1484
        %v1596 = vpop.f32.mrf.mxu0
        %v1597 = vadd.f32 0.0, %v1596
        %1598 = vmatmul.f32.gmra.mxu0 %v1487
        %v1599 = vpop.f32.mrf.mxu0
        %v1600 = vadd.f32 0.0, %v1599
        %1601 = vmatmul.f32.gmra.mxu0 %v1490
        %v1602 = vpop.f32.mrf.mxu0
        %v1603 = vadd.f32 0.0, %v1602
        %1604 = vmatmul.f32.gmra.mxu0 %v1493
        %v1605 = vpop.f32.mrf.mxu0
        %v1606 = vadd.f32 0.0, %v1605
        %1607 = vmatmul.f32.gmra.mxu0 %v1496
        %v1608 = vpop.f32.mrf.mxu0
        %v1609 = vadd.f32 0.0, %v1608
        %1610 = vmatmul.f32.gmra.mxu0 %v1499
        %v1611 = vpop.f32.mrf.mxu0
        %v1612 = vadd.f32 0.0, %v1611
        %1613 = vmatmul.f32.gmra.mxu0 %v1502
        %v1614 = vpop.f32.mrf.mxu0
        %v1615 = vadd.f32 0.0, %v1614
        %1616 = vmatmul.f32.gmra.mxu0 %v1505
        %v1617 = vpop.f32.mrf.mxu0
        %v1618 = vadd.f32 0.0, %v1617
        %1619 = vmatmul.f32.gmra.mxu0 %v1508
        %v1620 = vpop.f32.mrf.mxu0
        %v1621 = vadd.f32 0.0, %v1620
        %1622 = vmatmul.f32.gmra.mxu0 %v1511
        %v1623 = vpop.f32.mrf.mxu0
        %v1624 = vadd.f32 0.0, %v1623
        %1625 = vmatmul.f32.gmra.mxu0 %v1514
        %v1626 = vpop.f32.mrf.mxu0
        %v1627 = vadd.f32 0.0, %v1626
        %1628 = vmatmul.f32.gmra.mxu0 %v1517
        %v1629 = vpop.f32.mrf.mxu0
        %v1630 = vadd.f32 0.0, %v1629
        %1631 = vmatmul.f32.gmra.mxu0 %v1520
        %v1632 = vpop.f32.mrf.mxu0
        %v1633 = vadd.f32 0.0, %v1632
        %1634 = vmatmul.f32.gmra.mxu0 %v1523
        %v1635 = vpop.f32.mrf.mxu0
        %v1636 = vadd.f32 0.0, %v1635
        %1637 = vmatmul.f32.gmra.mxu0 %v1526
        %v1638 = vpop.f32.mrf.mxu0
        %v1639 = vadd.f32 0.0, %v1638
        %1640 = vmatmul.f32.gmra.mxu0 %v1529
        %v1641 = vpop.f32.mrf.mxu0
        %v1642 = vadd.f32 0.0, %v1641
        %1643 = vmatmul.f32.gmra.mxu0 %v1532
        %v1644 = vpop.f32.mrf.mxu0
        %v1645 = vadd.f32 0.0, %v1644
        %1646 = vmatmul.f32.gmra.mxu0 %v1535
        %v1647 = vpop.f32.mrf.mxu0
        %v1648 = vadd.f32 0.0, %v1647
        %1649 = vmatmul.f32.gmra.mxu0 %v1538
        %v1650 = vpop.f32.mrf.mxu0
        %v1651 = vadd.f32 0.0, %v1650
        %1652 = vmatmul.f32.gmra.mxu0 %v1541
        %v1653 = vpop.f32.mrf.mxu0
        %v1654 = vadd.f32 0.0, %v1653
        %1655 = vmatmul.f32.gmra.mxu0 %v1544
        %v1656 = vpop.f32.mrf.mxu0
        %v1657 = vadd.f32 0.0, %v1656
        %1658 = vmatmul.f32.gmra.mxu0 %v1547
        %v1659 = vpop.f32.mrf.mxu0
        %v1660 = vadd.f32 0.0, %v1659
        %1661 = vmatmul.f32.gmra.mxu0 %v1550
        %v1662 = vpop.f32.mrf.mxu0
        %v1663 = vadd.f32 0.0, %v1662
        %1664 = vmatmul.f32.gmra.mxu0 %v1553
        %v1665 = vpop.f32.mrf.mxu0
        %v1666 = vadd.f32 0.0, %v1665
        %1667 = vmatmul.f32.gmra.mxu0 %v1556
        %v1668 = vpop.f32.mrf.mxu0
        %v1669 = vadd.f32 0.0, %v1668
        %1670 = vmatmul.f32.gmra.mxu0 %v1559
        %v1671 = vpop.f32.mrf.mxu0
        %v1672 = vadd.f32 0.0, %v1671
        %1673 = vdwg.mxu0
        %1674 = vst.msk [vmem:[%s210] sm:$0xff] %vm289, %v1579
        %1675 = vst.msk [vmem:[%s210 + $0x8] sm:$0xff] %vm289, %v1582
        %1676 = vst.msk [vmem:[%s210 + $0x10] sm:$0xff] %vm289, %v1585
        %1677 = vst.msk [vmem:[%s210 + $0x18] sm:$0xff] %vm289, %v1588
        %1678 = vst.msk [vmem:[%s210 + $0x20] sm:$0xff] %vm289, %v1591
        %1679 = vst.msk [vmem:[%s210 + $0x28] sm:$0xff] %vm289, %v1594
        %1680 = vst.msk [vmem:[%s210 + $0x30] sm:$0xff] %vm289, %v1597
        %1681 = vst.msk [vmem:[%s210 + $0x38] sm:$0xff] %vm289, %v1600
        %1682 = vst.msk [vmem:[%s210 + $0x40] sm:$0xff] %vm289, %v1603
        %1683 = vst.msk [vmem:[%s210 + $0x48] sm:$0xff] %vm289, %v1606
        %1684 = vst.msk [vmem:[%s210 + $0x50] sm:$0xff] %vm289, %v1609
        %1685 = vst.msk [vmem:[%s210 + $0x58] sm:$0xff] %vm289, %v1612
        %1686 = vst.msk [vmem:[%s210 + $0x60] sm:$0xff] %vm289, %v1615
        %1687 = vst.msk [vmem:[%s210 + $0x68] sm:$0xff] %vm289, %v1618
        %1688 = vst.msk [vmem:[%s210 + $0x70] sm:$0xff] %vm289, %v1621
        %1689 = vst.msk [vmem:[%s210 + $0x78] sm:$0xff] %vm289, %v1624
        %1690 = vst.msk [vmem:[%s210 + $0x80] sm:$0xff] %vm289, %v1627
        %1691 = vst.msk [vmem:[%s210 + $0x88] sm:$0xff] %vm289, %v1630
        %1692 = vst.msk [vmem:[%s210 + $0x90] sm:$0xff] %vm289, %v1633
        %1693 = vst.msk [vmem:[%s210 + $0x98] sm:$0xff] %vm289, %v1636
        %1694 = vst.msk [vmem:[%s210 + $0xa0] sm:$0xff] %vm289, %v1639
        %1695 = vst.msk [vmem:[%s210 + $0xa8] sm:$0xff] %vm289, %v1642
        %1696 = vst.msk [vmem:[%s210 + $0xb0] sm:$0xff] %vm289, %v1645
        %1697 = vst.msk [vmem:[%s210 + $0xb8] sm:$0xff] %vm289, %v1648
        %1698 = vst.msk [vmem:[%s210 + $0xc0] sm:$0xff] %vm289, %v1651
        %1699 = vst.msk [vmem:[%s210 + $0xc8] sm:$0xff] %vm289, %v1654
        %1700 = vst.msk [vmem:[%s210 + $0xd0] sm:$0xff] %vm289, %v1657
        %1701 = vst.msk [vmem:[%s210 + $0xd8] sm:$0xff] %vm289, %v1660
        %1702 = vst.msk [vmem:[%s210 + $0xe0] sm:$0xff] %vm289, %v1663
        %1703 = vst.msk [vmem:[%s210 + $0xe8] sm:$0xff] %vm289, %v1666
        %1704 = vst.msk [vmem:[%s210 + $0xf0] sm:$0xff] %vm289, %v1669
        %1705 = vst.msk [vmem:[%s210 + $0xf8] sm:$0xff] %vm289, %v1672
        %s1706 = smul.u32 32, %s19
        %p1707 = scmp.lt.s32.totalorder %s1706, 63
        %s1708 = scalar_select %p1707, %s1706, 63
        %s1709 = smul.addr %s1708, 8
        %s1710 = scalar_lea.vmem %s3, %s1709
        %s1711 = sand.u32 %s121, 1
        %s1712 = scalar_lea.sflag [#allocation3], %s1711
        %s1713 = sand.u32 %s121, 1
        %s1714 = smul.addr %s1713, 2
        %s1715 = scalar_lea.vmem [#allocation2], %s1714
        // Predicated region
        $region33: #{tpu_custom_call.1} parent=31 // pred_check
          %p1716 = pneg %p105
        $region34: #{tpu_custom_call.1} parent=31 // pred_check_branch
          %1718 = sbr.rel (%p1716) target = $region36
        $region35: #{tpu_custom_call.1} parent=31 // pred_region
          %s1719 = smul.u32 32, %s19
        $region36: #{tpu_custom_call.1} parent=31 // pred_fallthru
          _
        // Predicated region
        $region37: #{tpu_custom_call.1} parent=31 // pred_check
          %p1720 = pneg %p131
        $region38: #{tpu_custom_call.1} parent=31 // pred_check_branch
          %1722 = sbr.rel (%p1720) target = $region40
        $region39: #{tpu_custom_call.1} parent=31 // pred_region
          %s1723 = smul.u32 2, %s19
          %1725 = vsyncadd %s1712, 0
          %s1726 = scalar_lea.hbm %s4, %s1723
          %s1728 = sshll.u32 %s1715, 4
          %s1729 = int_to_ptr.vmem [resolvable:$true] %s1728
          %s1730 = sshll.u32 %s1726, 4
          %s1731 = int_to_ptr.hbm [resolvable:$true] %s1730
          %1733 = dma.vmem_to_hbm [thread:$0]  %s1729, 32, %s1731, %s1712
        $region40: #{tpu_custom_call.1} parent=31 // pred_fallthru
          _
      $region32: #{tpu_custom_call.1} parent=5 // pred_fallthru
        _
      %p1734 = scmp.le.s32.totalorder 2, %s14
      // Predicated region
      $region41: #{tpu_custom_call.1} parent=5 // pred_check
        %p1735 = pneg %p1734
      $region42: #{tpu_custom_call.1} parent=5 // pred_check_branch
        %1737 = sbr.rel (%p1735) target = $region44
      $region43: #{tpu_custom_call.1} parent=5 // pred_region
        %s1738 = ssub.s32 %s14, 2
        // Predicated region
        $region45: #{tpu_custom_call.1} parent=43 // pred_check
          %p1739 = pneg %p111
        $region46: #{tpu_custom_call.1} parent=43 // pred_check_branch
          %1741 = sbr.rel (%p1739) target = $region48
        $region47: #{tpu_custom_call.1} parent=43 // pred_region
          %s1742 = smul.u32 32, %s20
          %p1743 = scmp.lt.s32.totalorder %s1742, 63
          %s1744 = scalar_select %p1743, %s1742, 63
          %s1745 = smul.addr %s1744, 8
          %s1746 = scalar_lea.vmem %s3, %s1745
        $region48: #{tpu_custom_call.1} parent=43 // pred_fallthru
          _
        // Predicated region
        $region49: #{tpu_custom_call.1} parent=43 // pred_check
          %p1747 = pneg %p137
        $region50: #{tpu_custom_call.1} parent=43 // pred_check_branch
          %1749 = sbr.rel (%p1747) target = $region52
        $region51: #{tpu_custom_call.1} parent=43 // pred_region
          %s1750 = sand.u32 %s122, 1
          %s1751 = scalar_lea.sflag [#allocation3], %s1750
          %s1752 = sand.u32 %s122, 1
          %s1753 = smul.addr %s1752, 2
          %s1754 = scalar_lea.vmem [#allocation2], %s1753
          %1756 = dma.done %s1751, 32
        $region52: #{tpu_custom_call.1} parent=43 // pred_fallthru
          _
      $region44: #{tpu_custom_call.1} parent=5 // pred_fallthru
        _
    $region6: #{tpu_custom_call.1} parent=1 // loop_footer
      %s18 = sadd.s32 1, %s14
    $region7: #{tpu_custom_call.1} parent=1 // loop_footer_branch
      %13 = sbr.rel target = $region3
    $region8: #{tpu_custom_call.1} parent=1 // loop_exit
      _
    %1757 = vsyncpa [#allocation3], 1
    %s1758 = scalar_lea.sflag [#allocation3], 1
    %1759 = vsyncpa %s1758, 1

</llo_original>
